<compile_context>
chip_gen: v7x
topology: tpu7x:2x2x1
jax: 0.10.0
libtpu: 0.0.40
codegen_flags: <defaults>
</compile_context>

<pallas_src>
import functools

import jax
import jax.numpy as jnp
from jax.experimental import pallas as pl
from jax.experimental.pallas import tpu as pltpu

# ---- module constants (from the PyTorch source) ----
EMBED_DIM = 20
FC_HIDDEN = 64
RNN_HIDDEN = 64
TOKEN2IDX = {"<pad>": 0, "<unk>": 1}
VOCAB_SIZE = len(TOKEN2IDX)  # 2


def _sig(v):
    # sigmoid(x) == 0.5*tanh(0.5*x) + 0.5 : exactly one EUP pass per gate.
    return 0.5 * jnp.tanh(0.5 * v) + 0.5


# ----------------------------- Pallas kernel -----------------------------
def _rnn_kernel(x_ref, mask_ref, w_in_ref, b_in_ref, whh_ref,
                w1_ref, b1_ref, w2_ref, b2_ref, out_ref, g_ref, *, T, Bp, H):
    H2 = 2 * H

    # ---- one big input-projection matmul, off the serial chain, into VMEM scratch
    # x_ref : [T*Bp, 2E] bf16  (cols 0:E = x[t], cols E:2E = x[T-1-t])
    # w_in  : [2E, 8H]   bf16  (fwd weights in even H-blocks, bwd weights in odd)
    g_ref[...] = (jnp.dot(x_ref[...], w_in_ref[...],
                          preferred_element_type=jnp.float32)
                  + b_in_ref[...])                       # [T*Bp, 8H] f32

    # ---- hoisted packed-sequence mask compare (removed from the per-step chain)
    Mb = mask_ref[...] > 0.0                             # [T*Bp, 2H] bool

    h = jnp.zeros((Bp, H2), jnp.float32)                 # [h_fwd | h_bwd]
    c = jnp.zeros((Bp, H2), jnp.float32)

    # ---- fused bidirectional recurrence, statically unrolled (T is small) ----
    # One [Bp, 2H] x [2H, 8H] bf16 MXU matmul per step (K = 128).
    # TODO(synk): if the bundle dump shows whh being re-pushed into the MXU weight
    # registers every step, switch to pltpu.matmul_push_rhs / matmul_acc_lhs /
    # matmul_pop to latch it once across the whole unrolled recurrence.
    for s in range(T):
        gx = g_ref[s * Bp:(s + 1) * Bp, :]               # aligned [Bp, 8H] vld
        gates = gx + jnp.dot(h.astype(jnp.bfloat16), whh_ref[...],
                             preferred_element_type=jnp.float32)
        # gate layout (each slice is a full 128-lane block, valid for H=64):
        #   [i_f|i_b | f_f|f_b | g_f|g_b | o_f|o_b]
        i = _sig(gates[:, 0 * H2:1 * H2])
        f = _sig(gates[:, 1 * H2:2 * H2])
        g = jnp.tanh(gates[:, 2 * H2:3 * H2])
        o = _sig(gates[:, 3 * H2:4 * H2])
        c_new = f * c + i * g
        h_new = o * jnp.tanh(c_new)
        m = Mb[s * Bp:(s + 1) * Bp, :]                   # [Bp, 2H] bool
        h = jnp.where(m, h_new, h)
        c = jnp.where(m, c_new, c)

    # ---- fc1 -> ReLU ----  (h layout already matches cat(hidden[-2], hidden[-1]))
    z1 = jnp.dot(h.astype(jnp.bfloat16), w1_ref[...],
                 preferred_element_type=jnp.float32) + b1_ref[...]
    z1 = jnp.maximum(z1, 0.0)
    # ---- fc2 (N=1) as VPU multiply + lane reduction, then sigmoid ----
    z2 = jnp.sum(z1 * w2_ref[...], axis=-1, keepdims=True) + b2_ref[...]
    out_ref[...] = _sig(z2)


# ----------------------------- params -----------------------------------
def init_params(key, vocab_size=VOCAB_SIZE, embed_dim=EMBED_DIM,
                rnn_hidden=RNN_HIDDEN, fc_hidden=FC_HIDDEN):
    ks = jax.random.split(key, 16)
    H = rnn_hidden
    s = 1.0 / jnp.sqrt(H)

    emb = jax.random.normal(ks[0], (vocab_size, embed_dim), jnp.float32)
    emb = emb.at[0].set(0.0)  # padding_idx=0

    def u(k, shape):
        return jax.random.uniform(k, shape, jnp.float32, -s, s)

    params = {
        "embedding": emb,
        # forward direction (PyTorch layout [4H, in], gate order i,f,g,o)
        "w_ih_f": u(ks[1], (4 * H, embed_dim)),
        "w_hh_f": u(ks[2], (4 * H, H)),
        "b_ih_f": u(ks[3], (4 * H,)),
        "b_hh_f": u(ks[4], (4 * H,)),
        # reverse direction
        "w_ih_b": u(ks[5], (4 * H, embed_dim)),
        "w_hh_b": u(ks[6], (4 * H, H)),
        "b_ih_b": u(ks[7], (4 * H,)),
        "b_hh_b": u(ks[8], (4 * H,)),
        # fc1 / fc2 (PyTorch layout [out, in])
        "fc1_w": u(ks[9], (fc_hidden, 2 * H)),
        "fc1_b": u(ks[10], (fc_hidden,)),
        "fc2_w": u(ks[11], (1, fc_hidden)),
        "fc2_b": u(ks[12], (1,)),
    }
    return params


def pack_params(params, rnn_hidden=RNN_HIDDEN, embed_dim=EMBED_DIM):
    """One-time repacking of the LSTM/fc weights into the fused kernel layout."""
    H, E = rnn_hidden, embed_dim

    # target gate column order: [i_f|i_b | f_f|f_b | g_f|g_b | o_f|o_b], block = H
    def gate_blocks(w):                         # [4H, in] -> [in, 4, H]
        return w.T.reshape(-1, 4, H)

    wf_in = gate_blocks(params["w_ih_f"])       # [E, 4, H]
    wb_in = gate_blocks(params["w_ih_b"])
    zE = jnp.zeros_like(wf_in)
    w_in_f = jnp.stack([wf_in, zE], axis=2).reshape(E, 8 * H)    # fwd cols filled
    w_in_b = jnp.stack([zE, wb_in], axis=2).reshape(E, 8 * H)    # bwd cols filled
    w_in = jnp.concatenate([w_in_f, w_in_b], axis=0)             # [2E, 8H]

    bf = (params["b_ih_f"] + params["b_hh_f"]).reshape(4, H)
    bb = (params["b_ih_b"] + params["b_hh_b"]).reshape(4, H)
    b_in = jnp.stack([bf, bb], axis=1).reshape(1, 8 * H)         # [1, 8H]

    whf = gate_blocks(params["w_hh_f"])         # [H, 4, H]
    whb = gate_blocks(params["w_hh_b"])
    zH = jnp.zeros_like(whf)
    whh_top = jnp.stack([whf, zH], axis=2).reshape(H, 8 * H)     # fwd h rows
    whh_bot = jnp.stack([zH, whb], axis=2).reshape(H, 8 * H)     # bwd h rows
    whh = jnp.concatenate([whh_top, whh_bot], axis=0)            # [2H, 8H] block-diag

    return {
        "embedding": params["embedding"],
        "w_in": w_in.astype(jnp.bfloat16),       # MXU operand -> bf16
        "b_in": b_in,                            # f32
        "whh": whh.astype(jnp.bfloat16),         # MXU operand -> bf16
        "w1": params["fc1_w"].T.astype(jnp.bfloat16),   # [2H, F] bf16
        "b1": params["fc1_b"][None, :],          # [1, F] f32
        "w2": params["fc2_w"],                   # [1, F] f32 (VPU row)
        "b2": params["fc2_b"][None, :],          # [1, 1] f32
    }


# ----------------------------- wrapper -----------------------------------
@functools.partial(jax.jit, static_argnames=())
def rnn_forward(text, lengths, packed):
    """text: int32 [B, T], lengths: int32 [B] -> [B, 1] float32."""
    H = RNN_HIDDEN
    E = EMBED_DIM
    B, T = text.shape
    # NOTE: batch scaling goes into the M dimension of the per-step matmul
    # (just grow Bp) — the MXU absorbs extra rows up to ~128 (v5e) / ~256
    # (v6e/v7x) almost for free; a grid over batch is a serial loop on a
    # single-TC chip.  Only once Bp exceeds ~256 add a leading batch grid axis
    # with dimension_semantics=("parallel",) so v7x's two TensorCores shard it.
    Bp = ((B + 7) // 8) * 8                    # pad batch to a full sublane group
    pad = Bp - B

    # ---- embedding gather + padding (plain-JAX glue) ----
    emb = packed["embedding"]
    x = jnp.take(emb, text, axis=0).astype(jnp.float32)   # [B, T, E]
    x = jnp.transpose(x, (1, 0, 2))                        # [T, B, E]
    if pad:
        x = jnp.pad(x, ((0, 0), (0, pad), (0, 0)))
        lengths_p = jnp.concatenate(
            [lengths, jnp.zeros((pad,), lengths.dtype)], axis=0)
    else:
        lengths_p = lengths
    x_rev = x[::-1]                                        # time-reversed copy
    x_fb = jnp.concatenate([x, x_rev], axis=2).reshape(T * Bp, 2 * E)
    x_fb = x_fb.astype(jnp.bfloat16)                       # MXU operand -> bf16

    # ---- lane-wide packed-sequence mask for both directions ----
    mf = (jnp.arange(T)[:, None] < lengths_p[None, :]).astype(jnp.float32)  # [T, Bp]
    mb = mf[::-1]
    mask2 = jnp.concatenate(
        [jnp.broadcast_to(mf[:, :, None], (T, Bp, H)),
         jnp.broadcast_to(mb[:, :, None], (T, Bp, H))], axis=2
    ).reshape(T * Bp, 2 * H)

    vmem = pl.BlockSpec(memory_space=pltpu.MemorySpace.VMEM)
    kernel = functools.partial(_rnn_kernel, T=T, Bp=Bp, H=H)

    out = pl.pallas_call(
        kernel,
        out_shape=jax.ShapeDtypeStruct((Bp, 1), jnp.float32),
        in_specs=[vmem] * 9,
        out_specs=vmem,
        scratch_shapes=[pltpu.VMEM((T * Bp, 8 * H), jnp.float32)],  # gate slab G
    )(x_fb, mask2, packed["w_in"], packed["b_in"], packed["whh"],
      packed["w1"], packed["b1"], packed["w2"], packed["b2"])
    return out[:B]


# ----------------------------- pure-JAX reference -------------------------
def rnn_reference(text, lengths, params):
    H = RNN_HIDDEN
    emb = params["embedding"]
    x = jnp.take(emb, text, axis=0).astype(jnp.float32)     # [B, T, E]
    B, T, _ = x.shape
    mask = (jnp.arange(T)[None, :] < lengths[:, None]).astype(jnp.float32)  # [B, T]

    def run_dir(w_ih, w_hh, b_ih, b_hh, reverse):
        wih, whh = w_ih.T, w_hh.T
        b = (b_ih + b_hh)[None, :]
        h = jnp.zeros((B, H), jnp.float32)
        c = jnp.zeros((B, H), jnp.float32)
        ts = range(T - 1, -1, -1) if reverse else range(T)
        for t in ts:
            gates = x[:, t] @ wih + h @ whh + b
            i = jax.nn.sigmoid(gates[:, 0:H])
            f = jax.nn.sigmoid(gates[:, H:2 * H])
            g = jnp.tanh(gates[:, 2 * H:3 * H])
            o = jax.nn.sigmoid(gates[:, 3 * H:4 * H])
            c_new = f * c + i * g
            h_new = o * jnp.tanh(c_new)
            m = mask[:, t][:, None]
            h = m * h_new + (1 - m) * h
            c = m * c_new + (1 - m) * c
        return h

    h_f = run_dir(params["w_ih_f"], params["w_hh_f"],
                  params["b_ih_f"], params["b_hh_f"], False)
    h_b = run_dir(params["w_ih_b"], params["w_hh_b"],
                  params["b_ih_b"], params["b_hh_b"], True)
    hcat = jnp.concatenate([h_f, h_b], axis=1)
    z1 = jnp.maximum(hcat @ params["fc1_w"].T + params["fc1_b"], 0.0)
    z2 = z1 @ params["fc2_w"].T + params["fc2_b"]
    return jax.nn.sigmoid(z2)


# ----------------------------- main ---------------------------------------
if __name__ == "__main__":
    key = jax.random.PRNGKey(0)
    pkey, dkey = jax.random.split(key)

    B, T = 4, 8
    params = init_params(pkey)
    packed = pack_params(params)          # one-time weight repacking / bf16 cast

    lengths = jnp.array([8, 5, 3, 6], dtype=jnp.int32)
    # tokens in {0 (<pad>), 1 (<unk>)}: valid positions are <unk>, padded tail is <pad>
    text = (jnp.arange(T)[None, :] < lengths[:, None]).astype(jnp.int32)    # [B, T]

    out = rnn_forward(text, lengths, packed)
    out = jax.block_until_ready(out)

    ref = rnn_reference(text, lengths, params)
    assert out.shape == (B, 1)
    # bf16 MXU operands -> loosened tolerance vs. the pure-f32 reference
    assert jnp.allclose(out, ref, rtol=3e-2, atol=3e-2), (out, ref)

    print("KERNEL_OK")
</pallas_src>

<mosaic_0001>
module attributes {stable_mosaic.version = 11 : i64} {
  func.func @_rnn_kernel(%arg0: memref<64x40xbf16, #tpu.memory_space<vmem>>, %arg1: memref<64x128xf32, #tpu.memory_space<vmem>>, %arg2: memref<40x512xbf16, #tpu.memory_space<vmem>>, %arg3: memref<1x512xf32, #tpu.memory_space<vmem>>, %arg4: memref<128x512xbf16, #tpu.memory_space<vmem>>, %arg5: memref<128x64xbf16, #tpu.memory_space<vmem>>, %arg6: memref<1x64xf32, #tpu.memory_space<vmem>>, %arg7: memref<1x64xf32, #tpu.memory_space<vmem>>, %arg8: memref<1x1xf32, #tpu.memory_space<vmem>>, %arg9: memref<8x1xf32, #tpu.memory_space<vmem>>, %arg10: memref<64x512xf32, #tpu.memory_space<vmem>>) attributes {dimension_semantics = [], scalar_prefetch = 0 : i64, scratch_operands = 1 : i64, tpu.core_type = #tpu.core_type<tc>} {
    %c0 = arith.constant 0 : index
    %c0_0 = arith.constant 0 : index
    %0 = vector.load %arg0[%c0, %c0_0] : memref<64x40xbf16, #tpu.memory_space<vmem>>, vector<64x40xbf16>
    %c0_1 = arith.constant 0 : index
    %c0_2 = arith.constant 0 : index
    %1 = vector.load %arg2[%c0_1, %c0_2] : memref<40x512xbf16, #tpu.memory_space<vmem>>, vector<40x512xbf16>
    %cst = arith.constant dense<0.000000e+00> : vector<64x512xf32>
    %2 = tpu.matmul %0, %1, %cst {dimension_numbers = #tpu.dot_dimension_numbers<[1], [0], [0], [1], [0, 0, 1, 1], [], []>} : vector<64x40xbf16>, vector<40x512xbf16>, vector<64x512xf32> -> vector<64x512xf32>
    %c0_3 = arith.constant 0 : index
    %c0_4 = arith.constant 0 : index
    %3 = vector.load %arg3[%c0_3, %c0_4] : memref<1x512xf32, #tpu.memory_space<vmem>>, vector<1x512xf32>
    %4 = vector.broadcast %3 : vector<1x512xf32> to vector<64x512xf32>
    %5 = arith.addf %2, %4 : vector<64x512xf32>
    %c0_5 = arith.constant 0 : index
    %c0_6 = arith.constant 0 : index
    %6 = vector.load %arg10[%c0_5, %c0_6] : memref<64x512xf32, #tpu.memory_space<vmem>>, vector<64x512xf32>
    tpu.vector_store %arg10[%c0_5, %c0_6], %5 {strides = array<i32>} : memref<64x512xf32, #tpu.memory_space<vmem>>, vector<64x512xf32>,
    %c0_7 = arith.constant 0 : index
    %c0_8 = arith.constant 0 : index
    %7 = vector.load %arg1[%c0_7, %c0_8] : memref<64x128xf32, #tpu.memory_space<vmem>>, vector<64x128xf32>
    %cst_9 = arith.constant 0.000000e+00 : f32
    %8 = vector.broadcast %cst_9 : f32 to vector<64x128xf32>
    %9 = arith.cmpf ogt, %7, %8 : vector<64x128xf32>
    %cst_10 = arith.constant 0.000000e+00 : f32
    %10 = vector.broadcast %cst_10 : f32 to vector<8x128xf32>
    %cst_11 = arith.constant 0.000000e+00 : f32
    %11 = vector.broadcast %cst_11 : f32 to vector<8x128xf32>
    %c0_12 = arith.constant 0 : index
    %c0_13 = arith.constant 0 : index
    %12 = vector.load %arg10[%c0_12, %c0_13] : memref<64x512xf32, #tpu.memory_space<vmem>>, vector<8x512xf32>
    %13 = arith.truncf %10 : vector<8x128xf32> to vector<8x128xbf16>
    %c0_14 = arith.constant 0 : index
    %c0_15 = arith.constant 0 : index
    %14 = vector.load %arg4[%c0_14, %c0_15] : memref<128x512xbf16, #tpu.memory_space<vmem>>, vector<128x512xbf16>
    %cst_16 = arith.constant dense<0.000000e+00> : vector<8x512xf32>
    %15 = tpu.matmul %13, %14, %cst_16 {dimension_numbers = #tpu.dot_dimension_numbers<[1], [0], [0], [1], [0, 0, 1, 1], [], []>} : vector<8x128xbf16>, vector<128x512xbf16>, vector<8x512xf32> -> vector<8x512xf32>
    %16 = arith.addf %12, %15 : vector<8x512xf32>
    %17 = vector.extract_strided_slice %16 {offsets = [0, 0], sizes = [8, 128], strides = [1, 1]} : vector<8x512xf32> to vector<8x128xf32>
    %cst_17 = arith.constant 5.000000e-01 : f32
    %18 = vector.broadcast %cst_17 : f32 to vector<8x128xf32>
    %19 = arith.mulf %18, %17 : vector<8x128xf32>
    %20 = math.tanh %19 : vector<8x128xf32>
    %cst_18 = arith.constant 5.000000e-01 : f32
    %21 = vector.broadcast %cst_18 : f32 to vector<8x128xf32>
    %22 = arith.mulf %21, %20 : vector<8x128xf32>
    %cst_19 = arith.constant 5.000000e-01 : f32
    %23 = vector.broadcast %cst_19 : f32 to vector<8x128xf32>
    %24 = arith.addf %22, %23 : vector<8x128xf32>
    %25 = vector.extract_strided_slice %16 {offsets = [0, 128], sizes = [8, 128], strides = [1, 1]} : vector<8x512xf32> to vector<8x128xf32>
    %cst_20 = arith.constant 5.000000e-01 : f32
    %26 = vector.broadcast %cst_20 : f32 to vector<8x128xf32>
    %27 = arith.mulf %26, %25 : vector<8x128xf32>
    %28 = math.tanh %27 : vector<8x128xf32>
    %cst_21 = arith.constant 5.000000e-01 : f32
    %29 = vector.broadcast %cst_21 : f32 to vector<8x128xf32>
    %30 = arith.mulf %29, %28 : vector<8x128xf32>
    %cst_22 = arith.constant 5.000000e-01 : f32
    %31 = vector.broadcast %cst_22 : f32 to vector<8x128xf32>
    %32 = arith.addf %30, %31 : vector<8x128xf32>
    %33 = vector.extract_strided_slice %16 {offsets = [0, 256], sizes = [8, 128], strides = [1, 1]} : vector<8x512xf32> to vector<8x128xf32>
    %34 = math.tanh %33 : vector<8x128xf32>
    %35 = vector.extract_strided_slice %16 {offsets = [0, 384], sizes = [8, 128], strides = [1, 1]} : vector<8x512xf32> to vector<8x128xf32>
    %cst_23 = arith.constant 5.000000e-01 : f32
    %36 = vector.broadcast %cst_23 : f32 to vector<8x128xf32>
    %37 = arith.mulf %36, %35 : vector<8x128xf32>
    %38 = math.tanh %37 : vector<8x128xf32>
    %cst_24 = arith.constant 5.000000e-01 : f32
    %39 = vector.broadcast %cst_24 : f32 to vector<8x128xf32>
    %40 = arith.mulf %39, %38 : vector<8x128xf32>
    %cst_25 = arith.constant 5.000000e-01 : f32
    %41 = vector.broadcast %cst_25 : f32 to vector<8x128xf32>
    %42 = arith.addf %40, %41 : vector<8x128xf32>
    %43 = arith.mulf %32, %11 : vector<8x128xf32>
    %44 = arith.mulf %24, %34 : vector<8x128xf32>
    %45 = arith.addf %43, %44 : vector<8x128xf32>
    %46 = math.tanh %45 : vector<8x128xf32>
    %47 = arith.mulf %42, %46 : vector<8x128xf32>
    %48 = vector.extract_strided_slice %9 {offsets = [0, 0], sizes = [8, 128], strides = [1, 1]} : vector<64x128xi1> to vector<8x128xi1>
    %49 = arith.select %48, %47, %10 : vector<8x128xi1>, vector<8x128xf32>
    %50 = arith.select %48, %45, %11 : vector<8x128xi1>, vector<8x128xf32>
    %c8 = arith.constant 8 : index
    %c0_26 = arith.constant 0 : index
    %51 = vector.load %arg10[%c8, %c0_26] : memref<64x512xf32, #tpu.memory_space<vmem>>, vector<8x512xf32>
    %52 = arith.truncf %49 : vector<8x128xf32> to vector<8x128xbf16>
    %c0_27 = arith.constant 0 : index
    %c0_28 = arith.constant 0 : index
    %53 = vector.load %arg4[%c0_27, %c0_28] : memref<128x512xbf16, #tpu.memory_space<vmem>>, vector<128x512xbf16>
    %cst_29 = arith.constant dense<0.000000e+00> : vector<8x512xf32>
    %54 = tpu.matmul %52, %53, %cst_29 {dimension_numbers = #tpu.dot_dimension_numbers<[1], [0], [0], [1], [0, 0, 1, 1], [], []>} : vector<8x128xbf16>, vector<128x512xbf16>, vector<8x512xf32> -> vector<8x512xf32>
    %55 = arith.addf %51, %54 : vector<8x512xf32>
    %56 = vector.extract_strided_slice %55 {offsets = [0, 0], sizes = [8, 128], strides = [1, 1]} : vector<8x512xf32> to vector<8x128xf32>
    %cst_30 = arith.constant 5.000000e-01 : f32
    %57 = vector.broadcast %cst_30 : f32 to vector<8x128xf32>
    %58 = arith.mulf %57, %56 : vector<8x128xf32>
    %59 = math.tanh %58 : vector<8x128xf32>
    %cst_31 = arith.constant 5.000000e-01 : f32
    %60 = vector.broadcast %cst_31 : f32 to vector<8x128xf32>
    %61 = arith.mulf %60, %59 : vector<8x128xf32>
    %cst_32 = arith.constant 5.000000e-01 : f32
    %62 = vector.broadcast %cst_32 : f32 to vector<8x128xf32>
    %63 = arith.addf %61, %62 : vector<8x128xf32>
    %64 = vector.extract_strided_slice %55 {offsets = [0, 128], sizes = [8, 128], strides = [1, 1]} : vector<8x512xf32> to vector<8x128xf32>
    %cst_33 = arith.constant 5.000000e-01 : f32
    %65 = vector.broadcast %cst_33 : f32 to vector<8x128xf32>
    %66 = arith.mulf %65, %64 : vector<8x128xf32>
    %67 = math.tanh %66 : vector<8x128xf32>
    %cst_34 = arith.constant 5.000000e-01 : f32
    %68 = vector.broadcast %cst_34 : f32 to vector<8x128xf32>
    %69 = arith.mulf %68, %67 : vector<8x128xf32>
    %cst_35 = arith.constant 5.000000e-01 : f32
    %70 = vector.broadcast %cst_35 : f32 to vector<8x128xf32>
    %71 = arith.addf %69, %70 : vector<8x128xf32>
    %72 = vector.extract_strided_slice %55 {offsets = [0, 256], sizes = [8, 128], strides = [1, 1]} : vector<8x512xf32> to vector<8x128xf32>
    %73 = math.tanh %72 : vector<8x128xf32>
    %74 = vector.extract_strided_slice %55 {offsets = [0, 384], sizes = [8, 128], strides = [1, 1]} : vector<8x512xf32> to vector<8x128xf32>
    %cst_36 = arith.constant 5.000000e-01 : f32
    %75 = vector.broadcast %cst_36 : f32 to vector<8x128xf32>
    %76 = arith.mulf %75, %74 : vector<8x128xf32>
    %77 = math.tanh %76 : vector<8x128xf32>
    %cst_37 = arith.constant 5.000000e-01 : f32
    %78 = vector.broadcast %cst_37 : f32 to vector<8x128xf32>
    %79 = arith.mulf %78, %77 : vector<8x128xf32>
    %cst_38 = arith.constant 5.000000e-01 : f32
    %80 = vector.broadcast %cst_38 : f32 to vector<8x128xf32>
    %81 = arith.addf %79, %80 : vector<8x128xf32>
    %82 = arith.mulf %71, %50 : vector<8x128xf32>
    %83 = arith.mulf %63, %73 : vector<8x128xf32>
    %84 = arith.addf %82, %83 : vector<8x128xf32>
    %85 = math.tanh %84 : vector<8x128xf32>
    %86 = arith.mulf %81, %85 : vector<8x128xf32>
    %87 = vector.extract_strided_slice %9 {offsets = [8, 0], sizes = [8, 128], strides = [1, 1]} : vector<64x128xi1> to vector<8x128xi1>
    %88 = arith.select %87, %86, %49 : vector<8x128xi1>, vector<8x128xf32>
    %89 = arith.select %87, %84, %50 : vector<8x128xi1>, vector<8x128xf32>
    %c16 = arith.constant 16 : index
    %c0_39 = arith.constant 0 : index
    %90 = vector.load %arg10[%c16, %c0_39] : memref<64x512xf32, #tpu.memory_space<vmem>>, vector<8x512xf32>
    %91 = arith.truncf %88 : vector<8x128xf32> to vector<8x128xbf16>
    %c0_40 = arith.constant 0 : index
    %c0_41 = arith.constant 0 : index
    %92 = vector.load %arg4[%c0_40, %c0_41] : memref<128x512xbf16, #tpu.memory_space<vmem>>, vector<128x512xbf16>
    %cst_42 = arith.constant dense<0.000000e+00> : vector<8x512xf32>
    %93 = tpu.matmul %91, %92, %cst_42 {dimension_numbers = #tpu.dot_dimension_numbers<[1], [0], [0], [1], [0, 0, 1, 1], [], []>} : vector<8x128xbf16>, vector<128x512xbf16>, vector<8x512xf32> -> vector<8x512xf32>
    %94 = arith.addf %90, %93 : vector<8x512xf32>
    %95 = vector.extract_strided_slice %94 {offsets = [0, 0], sizes = [8, 128], strides = [1, 1]} : vector<8x512xf32> to vector<8x128xf32>
    %cst_43 = arith.constant 5.000000e-01 : f32
    %96 = vector.broadcast %cst_43 : f32 to vector<8x128xf32>
    %97 = arith.mulf %96, %95 : vector<8x128xf32>
    %98 = math.tanh %97 : vector<8x128xf32>
    %cst_44 = arith.constant 5.000000e-01 : f32
    %99 = vector.broadcast %cst_44 : f32 to vector<8x128xf32>
    %100 = arith.mulf %99, %98 : vector<8x128xf32>
    %cst_45 = arith.constant 5.000000e-01 : f32
    %101 = vector.broadcast %cst_45 : f32 to vector<8x128xf32>
    %102 = arith.addf %100, %101 : vector<8x128xf32>
    %103 = vector.extract_strided_slice %94 {offsets = [0, 128], sizes = [8, 128], strides = [1, 1]} : vector<8x512xf32> to vector<8x128xf32>
    %cst_46 = arith.constant 5.000000e-01 : f32
    %104 = vector.broadcast %cst_46 : f32 to vector<8x128xf32>
    %105 = arith.mulf %104, %103 : vector<8x128xf32>
    %106 = math.tanh %105 : vector<8x128xf32>
    %cst_47 = arith.constant 5.000000e-01 : f32
    %107 = vector.broadcast %cst_47 : f32 to vector<8x128xf32>
    %108 = arith.mulf %107, %106 : vector<8x128xf32>
    %cst_48 = arith.constant 5.000000e-01 : f32
    %109 = vector.broadcast %cst_48 : f32 to vector<8x128xf32>
    %110 = arith.addf %108, %109 : vector<8x128xf32>
    %111 = vector.extract_strided_slice %94 {offsets = [0, 256], sizes = [8, 128], strides = [1, 1]} : vector<8x512xf32> to vector<8x128xf32>
    %112 = math.tanh %111 : vector<8x128xf32>
    %113 = vector.extract_strided_slice %94 {offsets = [0, 384], sizes = [8, 128], strides = [1, 1]} : vector<8x512xf32> to vector<8x128xf32>
    %cst_49 = arith.constant 5.000000e-01 : f32
    %114 = vector.broadcast %cst_49 : f32 to vector<8x128xf32>
    %115 = arith.mulf %114, %113 : vector<8x128xf32>
    %116 = math.tanh %115 : vector<8x128xf32>
    %cst_50 = arith.constant 5.000000e-01 : f32
    %117 = vector.broadcast %cst_50 : f32 to vector<8x128xf32>
    %118 = arith.mulf %117, %116 : vector<8x128xf32>
    %cst_51 = arith.constant 5.000000e-01 : f32
    %119 = vector.broadcast %cst_51 : f32 to vector<8x128xf32>
    %120 = arith.addf %118, %119 : vector<8x128xf32>
    %121 = arith.mulf %110, %89 : vector<8x128xf32>
    %122 = arith.mulf %102, %112 : vector<8x128xf32>
    %123 = arith.addf %121, %122 : vector<8x128xf32>
    %124 = math.tanh %123 : vector<8x128xf32>
    %125 = arith.mulf %120, %124 : vector<8x128xf32>
    %126 = vector.extract_strided_slice %9 {offsets = [16, 0], sizes = [8, 128], strides = [1, 1]} : vector<64x128xi1> to vector<8x128xi1>
    %127 = arith.select %126, %125, %88 : vector<8x128xi1>, vector<8x128xf32>
    %128 = arith.select %126, %123, %89 : vector<8x128xi1>, vector<8x128xf32>
    %c24 = arith.constant 24 : index
    %c0_52 = arith.constant 0 : index
    %129 = vector.load %arg10[%c24, %c0_52] : memref<64x512xf32, #tpu.memory_space<vmem>>, vector<8x512xf32>
    %130 = arith.truncf %127 : vector<8x128xf32> to vector<8x128xbf16>
    %c0_53 = arith.constant 0 : index
    %c0_54 = arith.constant 0 : index
    %131 = vector.load %arg4[%c0_53, %c0_54] : memref<128x512xbf16, #tpu.memory_space<vmem>>, vector<128x512xbf16>
    %cst_55 = arith.constant dense<0.000000e+00> : vector<8x512xf32>
    %132 = tpu.matmul %130, %131, %cst_55 {dimension_numbers = #tpu.dot_dimension_numbers<[1], [0], [0], [1], [0, 0, 1, 1], [], []>} : vector<8x128xbf16>, vector<128x512xbf16>, vector<8x512xf32> -> vector<8x512xf32>
    %133 = arith.addf %129, %132 : vector<8x512xf32>
    %134 = vector.extract_strided_slice %133 {offsets = [0, 0], sizes = [8, 128], strides = [1, 1]} : vector<8x512xf32> to vector<8x128xf32>
    %cst_56 = arith.constant 5.000000e-01 : f32
    %135 = vector.broadcast %cst_56 : f32 to vector<8x128xf32>
    %136 = arith.mulf %135, %134 : vector<8x128xf32>
    %137 = math.tanh %136 : vector<8x128xf32>
    %cst_57 = arith.constant 5.000000e-01 : f32
    %138 = vector.broadcast %cst_57 : f32 to vector<8x128xf32>
    %139 = arith.mulf %138, %137 : vector<8x128xf32>
    %cst_58 = arith.constant 5.000000e-01 : f32
    %140 = vector.broadcast %cst_58 : f32 to vector<8x128xf32>
    %141 = arith.addf %139, %140 : vector<8x128xf32>
    %142 = vector.extract_strided_slice %133 {offsets = [0, 128], sizes = [8, 128], strides = [1, 1]} : vector<8x512xf32> to vector<8x128xf32>
    %cst_59 = arith.constant 5.000000e-01 : f32
    %143 = vector.broadcast %cst_59 : f32 to vector<8x128xf32>
    %144 = arith.mulf %143, %142 : vector<8x128xf32>
    %145 = math.tanh %144 : vector<8x128xf32>
    %cst_60 = arith.constant 5.000000e-01 : f32
    %146 = vector.broadcast %cst_60 : f32 to vector<8x128xf32>
    %147 = arith.mulf %146, %145 : vector<8x128xf32>
    %cst_61 = arith.constant 5.000000e-01 : f32
    %148 = vector.broadcast %cst_61 : f32 to vector<8x128xf32>
    %149 = arith.addf %147, %148 : vector<8x128xf32>
    %150 = vector.extract_strided_slice %133 {offsets = [0, 256], sizes = [8, 128], strides = [1, 1]} : vector<8x512xf32> to vector<8x128xf32>
    %151 = math.tanh %150 : vector<8x128xf32>
    %152 = vector.extract_strided_slice %133 {offsets = [0, 384], sizes = [8, 128], strides = [1, 1]} : vector<8x512xf32> to vector<8x128xf32>
    %cst_62 = arith.constant 5.000000e-01 : f32
    %153 = vector.broadcast %cst_62 : f32 to vector<8x128xf32>
    %154 = arith.mulf %153, %152 : vector<8x128xf32>
    %155 = math.tanh %154 : vector<8x128xf32>
    %cst_63 = arith.constant 5.000000e-01 : f32
    %156 = vector.broadcast %cst_63 : f32 to vector<8x128xf32>
    %157 = arith.mulf %156, %155 : vector<8x128xf32>
    %cst_64 = arith.constant 5.000000e-01 : f32
    %158 = vector.broadcast %cst_64 : f32 to vector<8x128xf32>
    %159 = arith.addf %157, %158 : vector<8x128xf32>
    %160 = arith.mulf %149, %128 : vector<8x128xf32>
    %161 = arith.mulf %141, %151 : vector<8x128xf32>
    %162 = arith.addf %160, %161 : vector<8x128xf32>
    %163 = math.tanh %162 : vector<8x128xf32>
    %164 = arith.mulf %159, %163 : vector<8x128xf32>
    %165 = vector.extract_strided_slice %9 {offsets = [24, 0], sizes = [8, 128], strides = [1, 1]} : vector<64x128xi1> to vector<8x128xi1>
    %166 = arith.select %165, %164, %127 : vector<8x128xi1>, vector<8x128xf32>
    %167 = arith.select %165, %162, %128 : vector<8x128xi1>, vector<8x128xf32>
    %c32 = arith.constant 32 : index
    %c0_65 = arith.constant 0 : index
    %168 = vector.load %arg10[%c32, %c0_65] : memref<64x512xf32, #tpu.memory_space<vmem>>, vector<8x512xf32>
    %169 = arith.truncf %166 : vector<8x128xf32> to vector<8x128xbf16>
    %c0_66 = arith.constant 0 : index
    %c0_67 = arith.constant 0 : index
    %170 = vector.load %arg4[%c0_66, %c0_67] : memref<128x512xbf16, #tpu.memory_space<vmem>>, vector<128x512xbf16>
    %cst_68 = arith.constant dense<0.000000e+00> : vector<8x512xf32>
    %171 = tpu.matmul %169, %170, %cst_68 {dimension_numbers = #tpu.dot_dimension_numbers<[1], [0], [0], [1], [0, 0, 1, 1], [], []>} : vector<8x128xbf16>, vector<128x512xbf16>, vector<8x512xf32> -> vector<8x512xf32>
    %172 = arith.addf %168, %171 : vector<8x512xf32>
    %173 = vector.extract_strided_slice %172 {offsets = [0, 0], sizes = [8, 128], strides = [1, 1]} : vector<8x512xf32> to vector<8x128xf32>
    %cst_69 = arith.constant 5.000000e-01 : f32
    %174 = vector.broadcast %cst_69 : f32 to vector<8x128xf32>
    %175 = arith.mulf %174, %173 : vector<8x128xf32>
    %176 = math.tanh %175 : vector<8x128xf32>
    %cst_70 = arith.constant 5.000000e-01 : f32
    %177 = vector.broadcast %cst_70 : f32 to vector<8x128xf32>
    %178 = arith.mulf %177, %176 : vector<8x128xf32>
    %cst_71 = arith.constant 5.000000e-01 : f32
    %179 = vector.broadcast %cst_71 : f32 to vector<8x128xf32>
    %180 = arith.addf %178, %179 : vector<8x128xf32>
    %181 = vector.extract_strided_slice %172 {offsets = [0, 128], sizes = [8, 128], strides = [1, 1]} : vector<8x512xf32> to vector<8x128xf32>
    %cst_72 = arith.constant 5.000000e-01 : f32
    %182 = vector.broadcast %cst_72 : f32 to vector<8x128xf32>
    %183 = arith.mulf %182, %181 : vector<8x128xf32>
    %184 = math.tanh %183 : vector<8x128xf32>
    %cst_73 = arith.constant 5.000000e-01 : f32
    %185 = vector.broadcast %cst_73 : f32 to vector<8x128xf32>
    %186 = arith.mulf %185, %184 : vector<8x128xf32>
    %cst_74 = arith.constant 5.000000e-01 : f32
    %187 = vector.broadcast %cst_74 : f32 to vector<8x128xf32>
    %188 = arith.addf %186, %187 : vector<8x128xf32>
    %189 = vector.extract_strided_slice %172 {offsets = [0, 256], sizes = [8, 128], strides = [1, 1]} : vector<8x512xf32> to vector<8x128xf32>
    %190 = math.tanh %189 : vector<8x128xf32>
    %191 = vector.extract_strided_slice %172 {offsets = [0, 384], sizes = [8, 128], strides = [1, 1]} : vector<8x512xf32> to vector<8x128xf32>
    %cst_75 = arith.constant 5.000000e-01 : f32
    %192 = vector.broadcast %cst_75 : f32 to vector<8x128xf32>
    %193 = arith.mulf %192, %191 : vector<8x128xf32>
    %194 = math.tanh %193 : vector<8x128xf32>
    %cst_76 = arith.constant 5.000000e-01 : f32
    %195 = vector.broadcast %cst_76 : f32 to vector<8x128xf32>
    %196 = arith.mulf %195, %194 : vector<8x128xf32>
    %cst_77 = arith.constant 5.000000e-01 : f32
    %197 = vector.broadcast %cst_77 : f32 to vector<8x128xf32>
    %198 = arith.addf %196, %197 : vector<8x128xf32>
    %199 = arith.mulf %188, %167 : vector<8x128xf32>
    %200 = arith.mulf %180, %190 : vector<8x128xf32>
    %201 = arith.addf %199, %200 : vector<8x128xf32>
    %202 = math.tanh %201 : vector<8x128xf32>
    %203 = arith.mulf %198, %202 : vector<8x128xf32>
    %204 = vector.extract_strided_slice %9 {offsets = [32, 0], sizes = [8, 128], strides = [1, 1]} : vector<64x128xi1> to vector<8x128xi1>
    %205 = arith.select %204, %203, %166 : vector<8x128xi1>, vector<8x128xf32>
    %206 = arith.select %204, %201, %167 : vector<8x128xi1>, vector<8x128xf32>
    %c40 = arith.constant 40 : index
    %c0_78 = arith.constant 0 : index
    %207 = vector.load %arg10[%c40, %c0_78] : memref<64x512xf32, #tpu.memory_space<vmem>>, vector<8x512xf32>
    %208 = arith.truncf %205 : vector<8x128xf32> to vector<8x128xbf16>
    %c0_79 = arith.constant 0 : index
    %c0_80 = arith.constant 0 : index
    %209 = vector.load %arg4[%c0_79, %c0_80] : memref<128x512xbf16, #tpu.memory_space<vmem>>, vector<128x512xbf16>
    %cst_81 = arith.constant dense<0.000000e+00> : vector<8x512xf32>
    %210 = tpu.matmul %208, %209, %cst_81 {dimension_numbers = #tpu.dot_dimension_numbers<[1], [0], [0], [1], [0, 0, 1, 1], [], []>} : vector<8x128xbf16>, vector<128x512xbf16>, vector<8x512xf32> -> vector<8x512xf32>
    %211 = arith.addf %207, %210 : vector<8x512xf32>
    %212 = vector.extract_strided_slice %211 {offsets = [0, 0], sizes = [8, 128], strides = [1, 1]} : vector<8x512xf32> to vector<8x128xf32>
    %cst_82 = arith.constant 5.000000e-01 : f32
    %213 = vector.broadcast %cst_82 : f32 to vector<8x128xf32>
    %214 = arith.mulf %213, %212 : vector<8x128xf32>
    %215 = math.tanh %214 : vector<8x128xf32>
    %cst_83 = arith.constant 5.000000e-01 : f32
    %216 = vector.broadcast %cst_83 : f32 to vector<8x128xf32>
    %217 = arith.mulf %216, %215 : vector<8x128xf32>
    %cst_84 = arith.constant 5.000000e-01 : f32
    %218 = vector.broadcast %cst_84 : f32 to vector<8x128xf32>
    %219 = arith.addf %217, %218 : vector<8x128xf32>
    %220 = vector.extract_strided_slice %211 {offsets = [0, 128], sizes = [8, 128], strides = [1, 1]} : vector<8x512xf32> to vector<8x128xf32>
    %cst_85 = arith.constant 5.000000e-01 : f32
    %221 = vector.broadcast %cst_85 : f32 to vector<8x128xf32>
    %222 = arith.mulf %221, %220 : vector<8x128xf32>
    %223 = math.tanh %222 : vector<8x128xf32>
    %cst_86 = arith.constant 5.000000e-01 : f32
    %224 = vector.broadcast %cst_86 : f32 to vector<8x128xf32>
    %225 = arith.mulf %224, %223 : vector<8x128xf32>
    %cst_87 = arith.constant 5.000000e-01 : f32
    %226 = vector.broadcast %cst_87 : f32 to vector<8x128xf32>
    %227 = arith.addf %225, %226 : vector<8x128xf32>
    %228 = vector.extract_strided_slice %211 {offsets = [0, 256], sizes = [8, 128], strides = [1, 1]} : vector<8x512xf32> to vector<8x128xf32>
    %229 = math.tanh %228 : vector<8x128xf32>
    %230 = vector.extract_strided_slice %211 {offsets = [0, 384], sizes = [8, 128], strides = [1, 1]} : vector<8x512xf32> to vector<8x128xf32>
    %cst_88 = arith.constant 5.000000e-01 : f32
    %231 = vector.broadcast %cst_88 : f32 to vector<8x128xf32>
    %232 = arith.mulf %231, %230 : vector<8x128xf32>
    %233 = math.tanh %232 : vector<8x128xf32>
    %cst_89 = arith.constant 5.000000e-01 : f32
    %234 = vector.broadcast %cst_89 : f32 to vector<8x128xf32>
    %235 = arith.mulf %234, %233 : vector<8x128xf32>
    %cst_90 = arith.constant 5.000000e-01 : f32
    %236 = vector.broadcast %cst_90 : f32 to vector<8x128xf32>
    %237 = arith.addf %235, %236 : vector<8x128xf32>
    %238 = arith.mulf %227, %206 : vector<8x128xf32>
    %239 = arith.mulf %219, %229 : vector<8x128xf32>
    %240 = arith.addf %238, %239 : vector<8x128xf32>
    %241 = math.tanh %240 : vector<8x128xf32>
    %242 = arith.mulf %237, %241 : vector<8x128xf32>
    %243 = vector.extract_strided_slice %9 {offsets = [40, 0], sizes = [8, 128], strides = [1, 1]} : vector<64x128xi1> to vector<8x128xi1>
    %244 = arith.select %243, %242, %205 : vector<8x128xi1>, vector<8x128xf32>
    %245 = arith.select %243, %240, %206 : vector<8x128xi1>, vector<8x128xf32>
    %c48 = arith.constant 48 : index
    %c0_91 = arith.constant 0 : index
    %246 = vector.load %arg10[%c48, %c0_91] : memref<64x512xf32, #tpu.memory_space<vmem>>, vector<8x512xf32>
    %247 = arith.truncf %244 : vector<8x128xf32> to vector<8x128xbf16>
    %c0_92 = arith.constant 0 : index
    %c0_93 = arith.constant 0 : index
    %248 = vector.load %arg4[%c0_92, %c0_93] : memref<128x512xbf16, #tpu.memory_space<vmem>>, vector<128x512xbf16>
    %cst_94 = arith.constant dense<0.000000e+00> : vector<8x512xf32>
    %249 = tpu.matmul %247, %248, %cst_94 {dimension_numbers = #tpu.dot_dimension_numbers<[1], [0], [0], [1], [0, 0, 1, 1], [], []>} : vector<8x128xbf16>, vector<128x512xbf16>, vector<8x512xf32> -> vector<8x512xf32>
    %250 = arith.addf %246, %249 : vector<8x512xf32>
    %251 = vector.extract_strided_slice %250 {offsets = [0, 0], sizes = [8, 128], strides = [1, 1]} : vector<8x512xf32> to vector<8x128xf32>
    %cst_95 = arith.constant 5.000000e-01 : f32
    %252 = vector.broadcast %cst_95 : f32 to vector<8x128xf32>
    %253 = arith.mulf %252, %251 : vector<8x128xf32>
    %254 = math.tanh %253 : vector<8x128xf32>
    %cst_96 = arith.constant 5.000000e-01 : f32
    %255 = vector.broadcast %cst_96 : f32 to vector<8x128xf32>
    %256 = arith.mulf %255, %254 : vector<8x128xf32>
    %cst_97 = arith.constant 5.000000e-01 : f32
    %257 = vector.broadcast %cst_97 : f32 to vector<8x128xf32>
    %258 = arith.addf %256, %257 : vector<8x128xf32>
    %259 = vector.extract_strided_slice %250 {offsets = [0, 128], sizes = [8, 128], strides = [1, 1]} : vector<8x512xf32> to vector<8x128xf32>
    %cst_98 = arith.constant 5.000000e-01 : f32
    %260 = vector.broadcast %cst_98 : f32 to vector<8x128xf32>
    %261 = arith.mulf %260, %259 : vector<8x128xf32>
    %262 = math.tanh %261 : vector<8x128xf32>
    %cst_99 = arith.constant 5.000000e-01 : f32
    %263 = vector.broadcast %cst_99 : f32 to vector<8x128xf32>
    %264 = arith.mulf %263, %262 : vector<8x128xf32>
    %cst_100 = arith.constant 5.000000e-01 : f32
    %265 = vector.broadcast %cst_100 : f32 to vector<8x128xf32>
    %266 = arith.addf %264, %265 : vector<8x128xf32>
    %267 = vector.extract_strided_slice %250 {offsets = [0, 256], sizes = [8, 128], strides = [1, 1]} : vector<8x512xf32> to vector<8x128xf32>
    %268 = math.tanh %267 : vector<8x128xf32>
    %269 = vector.extract_strided_slice %250 {offsets = [0, 384], sizes = [8, 128], strides = [1, 1]} : vector<8x512xf32> to vector<8x128xf32>
    %cst_101 = arith.constant 5.000000e-01 : f32
    %270 = vector.broadcast %cst_101 : f32 to vector<8x128xf32>
    %271 = arith.mulf %270, %269 : vector<8x128xf32>
    %272 = math.tanh %271 : vector<8x128xf32>
    %cst_102 = arith.constant 5.000000e-01 : f32
    %273 = vector.broadcast %cst_102 : f32 to vector<8x128xf32>
    %274 = arith.mulf %273, %272 : vector<8x128xf32>
    %cst_103 = arith.constant 5.000000e-01 : f32
    %275 = vector.broadcast %cst_103 : f32 to vector<8x128xf32>
    %276 = arith.addf %274, %275 : vector<8x128xf32>
    %277 = arith.mulf %266, %245 : vector<8x128xf32>
    %278 = arith.mulf %258, %268 : vector<8x128xf32>
    %279 = arith.addf %277, %278 : vector<8x128xf32>
    %280 = math.tanh %279 : vector<8x128xf32>
    %281 = arith.mulf %276, %280 : vector<8x128xf32>
    %282 = vector.extract_strided_slice %9 {offsets = [48, 0], sizes = [8, 128], strides = [1, 1]} : vector<64x128xi1> to vector<8x128xi1>
    %283 = arith.select %282, %281, %244 : vector<8x128xi1>, vector<8x128xf32>
    %284 = arith.select %282, %279, %245 : vector<8x128xi1>, vector<8x128xf32>
    %c56 = arith.constant 56 : index
    %c0_104 = arith.constant 0 : index
    %285 = vector.load %arg10[%c56, %c0_104] : memref<64x512xf32, #tpu.memory_space<vmem>>, vector<8x512xf32>
    %286 = arith.truncf %283 : vector<8x128xf32> to vector<8x128xbf16>
    %c0_105 = arith.constant 0 : index
    %c0_106 = arith.constant 0 : index
    %287 = vector.load %arg4[%c0_105, %c0_106] : memref<128x512xbf16, #tpu.memory_space<vmem>>, vector<128x512xbf16>
    %cst_107 = arith.constant dense<0.000000e+00> : vector<8x512xf32>
    %288 = tpu.matmul %286, %287, %cst_107 {dimension_numbers = #tpu.dot_dimension_numbers<[1], [0], [0], [1], [0, 0, 1, 1], [], []>} : vector<8x128xbf16>, vector<128x512xbf16>, vector<8x512xf32> -> vector<8x512xf32>
    %289 = arith.addf %285, %288 : vector<8x512xf32>
    %290 = vector.extract_strided_slice %289 {offsets = [0, 0], sizes = [8, 128], strides = [1, 1]} : vector<8x512xf32> to vector<8x128xf32>
    %cst_108 = arith.constant 5.000000e-01 : f32
    %291 = vector.broadcast %cst_108 : f32 to vector<8x128xf32>
    %292 = arith.mulf %291, %290 : vector<8x128xf32>
    %293 = math.tanh %292 : vector<8x128xf32>
    %cst_109 = arith.constant 5.000000e-01 : f32
    %294 = vector.broadcast %cst_109 : f32 to vector<8x128xf32>
    %295 = arith.mulf %294, %293 : vector<8x128xf32>
    %cst_110 = arith.constant 5.000000e-01 : f32
    %296 = vector.broadcast %cst_110 : f32 to vector<8x128xf32>
    %297 = arith.addf %295, %296 : vector<8x128xf32>
    %298 = vector.extract_strided_slice %289 {offsets = [0, 128], sizes = [8, 128], strides = [1, 1]} : vector<8x512xf32> to vector<8x128xf32>
    %cst_111 = arith.constant 5.000000e-01 : f32
    %299 = vector.broadcast %cst_111 : f32 to vector<8x128xf32>
    %300 = arith.mulf %299, %298 : vector<8x128xf32>
    %301 = math.tanh %300 : vector<8x128xf32>
    %cst_112 = arith.constant 5.000000e-01 : f32
    %302 = vector.broadcast %cst_112 : f32 to vector<8x128xf32>
    %303 = arith.mulf %302, %301 : vector<8x128xf32>
    %cst_113 = arith.constant 5.000000e-01 : f32
    %304 = vector.broadcast %cst_113 : f32 to vector<8x128xf32>
    %305 = arith.addf %303, %304 : vector<8x128xf32>
    %306 = vector.extract_strided_slice %289 {offsets = [0, 256], sizes = [8, 128], strides = [1, 1]} : vector<8x512xf32> to vector<8x128xf32>
    %307 = math.tanh %306 : vector<8x128xf32>
    %308 = vector.extract_strided_slice %289 {offsets = [0, 384], sizes = [8, 128], strides = [1, 1]} : vector<8x512xf32> to vector<8x128xf32>
    %cst_114 = arith.constant 5.000000e-01 : f32
    %309 = vector.broadcast %cst_114 : f32 to vector<8x128xf32>
    %310 = arith.mulf %309, %308 : vector<8x128xf32>
    %311 = math.tanh %310 : vector<8x128xf32>
    %cst_115 = arith.constant 5.000000e-01 : f32
    %312 = vector.broadcast %cst_115 : f32 to vector<8x128xf32>
    %313 = arith.mulf %312, %311 : vector<8x128xf32>
    %cst_116 = arith.constant 5.000000e-01 : f32
    %314 = vector.broadcast %cst_116 : f32 to vector<8x128xf32>
    %315 = arith.addf %313, %314 : vector<8x128xf32>
    %316 = arith.mulf %305, %284 : vector<8x128xf32>
    %317 = arith.mulf %297, %307 : vector<8x128xf32>
    %318 = arith.addf %316, %317 : vector<8x128xf32>
    %319 = math.tanh %318 : vector<8x128xf32>
    %320 = arith.mulf %315, %319 : vector<8x128xf32>
    %321 = vector.extract_strided_slice %9 {offsets = [56, 0], sizes = [8, 128], strides = [1, 1]} : vector<64x128xi1> to vector<8x128xi1>
    %322 = arith.select %321, %320, %283 : vector<8x128xi1>, vector<8x128xf32>
    %323 = arith.truncf %322 : vector<8x128xf32> to vector<8x128xbf16>
    %c0_117 = arith.constant 0 : index
    %c0_118 = arith.constant 0 : index
    %324 = vector.load %arg5[%c0_117, %c0_118] : memref<128x64xbf16, #tpu.memory_space<vmem>>, vector<128x64xbf16>
    %cst_119 = arith.constant dense<0.000000e+00> : vector<8x64xf32>
    %325 = tpu.matmul %323, %324, %cst_119 {dimension_numbers = #tpu.dot_dimension_numbers<[1], [0], [0], [1], [0, 0, 1, 1], [], []>} : vector<8x128xbf16>, vector<128x64xbf16>, vector<8x64xf32> -> vector<8x64xf32>
    %c0_120 = arith.constant 0 : index
    %c0_121 = arith.constant 0 : index
    %326 = vector.load %arg6[%c0_120, %c0_121] : memref<1x64xf32, #tpu.memory_space<vmem>>, vector<1x64xf32>
    %327 = vector.broadcast %326 : vector<1x64xf32> to vector<8x64xf32>
    %328 = arith.addf %325, %327 : vector<8x64xf32>
    %cst_122 = arith.constant 0.000000e+00 : f32
    %329 = vector.broadcast %cst_122 : f32 to vector<8x64xf32>
    %330 = arith.maximumf %328, %329 : vector<8x64xf32>
    %c0_123 = arith.constant 0 : index
    %c0_124 = arith.constant 0 : index
    %331 = vector.load %arg7[%c0_123, %c0_124] : memref<1x64xf32, #tpu.memory_space<vmem>>, vector<1x64xf32>
    %332 = vector.broadcast %331 : vector<1x64xf32> to vector<8x64xf32>
    %333 = arith.mulf %330, %332 : vector<8x64xf32>
    %cst_125 = arith.constant dense<0.000000e+00> : vector<8xf32>
    %334 = vector.multi_reduction <add>, %333, %cst_125 [1] : vector<8x64xf32> to vector<8xf32>
    %335 = vector.shape_cast %334 : vector<8xf32> to vector<8x1xf32>
    %c0_126 = arith.constant 0 : index
    %c0_127 = arith.constant 0 : index
    %336 = vector.load %arg8[%c0_126, %c0_127] : memref<1x1xf32, #tpu.memory_space<vmem>>, vector<1x1xf32>
    %337 = vector.broadcast %336 : vector<1x1xf32> to vector<8x1xf32>
    %338 = arith.addf %335, %337 : vector<8x1xf32>
    %cst_128 = arith.constant 5.000000e-01 : f32
    %339 = vector.broadcast %cst_128 : f32 to vector<8x1xf32>
    %340 = arith.mulf %339, %338 : vector<8x1xf32>
    %341 = math.tanh %340 : vector<8x1xf32>
    %cst_129 = arith.constant 5.000000e-01 : f32
    %342 = vector.broadcast %cst_129 : f32 to vector<8x1xf32>
    %343 = arith.mulf %342, %341 : vector<8x1xf32>
    %cst_130 = arith.constant 5.000000e-01 : f32
    %344 = vector.broadcast %cst_130 : f32 to vector<8x1xf32>
    %345 = arith.addf %343, %344 : vector<8x1xf32>
    %c0_131 = arith.constant 0 : index
    %c0_132 = arith.constant 0 : index
    %346 = vector.load %arg9[%c0_131, %c0_132] : memref<8x1xf32, #tpu.memory_space<vmem>>, vector<8x1xf32>
    tpu.vector_store %arg9[%c0_131, %c0_132], %345 {strides = array<i32>} : memref<8x1xf32, #tpu.memory_space<vmem>>, vector<8x1xf32>,
    return
  }
}

</mosaic_0001>

<llo_original>
// kernel: rnn_forward.1
$region0: #{rnn_forward.1}
  #allocation0 [shape = 'u32[]', space=smem, size = 0x4, offset = 0x4, fixed_abs, tag = 'smem constant byte address 0x4 - core index']
  #allocation1 [shape = 'u32[144,128]{1,0:T(1,128)}', space=vmem, size = 0x12000, scoped, tag = 'internal scratch']
  #allocation2 [shape = 'f32[64,512]{1,0:T(8,128)}', space=vmem, size = 0x20000, scoped, tag = 'scratch operand']
  #allocation3 [shape = 'f32[1,1]{1,0:T(1,128)S(1)}', space=vmem, size = 0x200, scoped, tag = 'scoped memory for rnn_forward.1']
  %s0 = inlined_call_operand.vmem [shape: bf16[64,40], index: 0, kind: input, shape index: {}]
  %s1 = inlined_call_operand.vmem [shape: f32[64,128], index: 1, kind: input, shape index: {}]
  %s2 = inlined_call_operand.vmem [shape: bf16[40,512], index: 2, kind: input, shape index: {}]
  %s3 = inlined_call_operand.vmem [shape: f32[1,512], index: 3, kind: input, shape index: {}]
  %s4 = inlined_call_operand.vmem [shape: bf16[128,512], index: 4, kind: input, shape index: {}]
  %s5 = inlined_call_operand.vmem [shape: bf16[128,64], index: 5, kind: input, shape index: {}]
  %s6 = inlined_call_operand.vmem [shape: f32[1,64], index: 6, kind: input, shape index: {}]
  %s7 = inlined_call_operand.vmem [shape: f32[1,64], index: 7, kind: input, shape index: {}]
  %s8 = inlined_call_operand.<no memory space> [shape: f32[1,1], index: 8, kind: input, shape index: {}]
  %s9 = inlined_call_operand.vmem [shape: f32[8,1], index: 9, kind: output, shape index: {}]
  %s10 = sld [smem:[#allocation0]]
  $region46: #{rnn_forward.1} parent=0
    _
  %s12 = ssub.s32 1, %s10
  %s13 = scalar_select 0, %s12, %s10
  %v14 = vstv %s8
  %15 = vst [vmem:[#allocation3] sm:$0x1] %v14
  // Predicated region
  $region2: #{rnn_forward.1} parent=0 // pred_check
    _
  $region3: #{rnn_forward.1} parent=0 // pred_check_branch
    %17 = sbr.rel (0) target = $region5
  $region4: #{rnn_forward.1} parent=0 // pred_region
    _
  $region5: #{rnn_forward.1} parent=0 // pred_fallthru
    _
  // Predicated region
  $region6: #{rnn_forward.1} parent=0 // pred_check
    _
  $region7: #{rnn_forward.1} parent=0 // pred_check_branch
    %19 = sbr.rel (0) target = $region9
  $region8: #{rnn_forward.1} parent=0 // pred_region
    _
  $region9: #{rnn_forward.1} parent=0 // pred_fallthru
    _
  // Predicated region
  $region10: #{rnn_forward.1} parent=0 // pred_check
    _
  $region11: #{rnn_forward.1} parent=0 // pred_check_branch
    %21 = sbr.rel (0) target = $region13
  $region12: #{rnn_forward.1} parent=0 // pred_region
    _
  $region13: #{rnn_forward.1} parent=0 // pred_fallthru
    _
  // Predicated region
  $region14: #{rnn_forward.1} parent=0 // pred_check
    _
  $region15: #{rnn_forward.1} parent=0 // pred_check_branch
    %23 = sbr.rel (0) target = $region17
  $region16: #{rnn_forward.1} parent=0 // pred_region
    _
  $region17: #{rnn_forward.1} parent=0 // pred_fallthru
    _
  // Predicated region
  $region18: #{rnn_forward.1} parent=0 // pred_check
    _
  $region19: #{rnn_forward.1} parent=0 // pred_check_branch
    %25 = sbr.rel (0) target = $region21
  $region20: #{rnn_forward.1} parent=0 // pred_region
    _
  $region21: #{rnn_forward.1} parent=0 // pred_fallthru
    _
  // Predicated region
  $region22: #{rnn_forward.1} parent=0 // pred_check
    _
  $region23: #{rnn_forward.1} parent=0 // pred_check_branch
    %27 = sbr.rel (0) target = $region25
  $region24: #{rnn_forward.1} parent=0 // pred_region
    _
  $region25: #{rnn_forward.1} parent=0 // pred_fallthru
    _
  // Predicated region
  $region26: #{rnn_forward.1} parent=0 // pred_check
    _
  $region27: #{rnn_forward.1} parent=0 // pred_check_branch
    %29 = sbr.rel (0) target = $region29
  $region28: #{rnn_forward.1} parent=0 // pred_region
    _
  $region29: #{rnn_forward.1} parent=0 // pred_fallthru
    _
  // Predicated region
  $region30: #{rnn_forward.1} parent=0 // pred_check
    _
  $region31: #{rnn_forward.1} parent=0 // pred_check_branch
    %31 = sbr.rel (0) target = $region33
  $region32: #{rnn_forward.1} parent=0 // pred_region
    _
  $region33: #{rnn_forward.1} parent=0 // pred_fallthru
    _
  // Predicated region
  $region34: #{rnn_forward.1} parent=0 // pred_check
    _
  $region35: #{rnn_forward.1} parent=0 // pred_check_branch
    %33 = sbr.rel (0) target = $region37
  $region36: #{rnn_forward.1} parent=0 // pred_region
    _
  $region37: #{rnn_forward.1} parent=0 // pred_fallthru
    _
  %v35 = vld [vmem:[%s0] sm:$0xf]
  %v36 = vld [vmem:[%s0 + $0x4] sm:$0xf]
  %v37 = vld [vmem:[%s0 + $0x8] sm:$0xf]
  %v38 = vld [vmem:[%s0 + $0xc] sm:$0xf]
  %v39 = vld [vmem:[%s0 + $0x10] sm:$0xf]
  %v40 = vld [vmem:[%s0 + $0x14] sm:$0xf]
  %v41 = vld [vmem:[%s0 + $0x18] sm:$0xf]
  %v42 = vld [vmem:[%s0 + $0x1c] sm:$0xf]
  %v43 = vld [vmem:[%s2] sm:$0xff]
  %v44 = vld [vmem:[%s2 + $0x8] sm:$0xff]
  %v45 = vld [vmem:[%s2 + $0x10] sm:$0xff]
  %v46 = vld [vmem:[%s2 + $0x18] sm:$0xff]
  %v47 = vld [vmem:[%s2 + $0x20] sm:$0xff]
  %v48 = vld [vmem:[%s2 + $0x28] sm:$0xff]
  %v49 = vld [vmem:[%s2 + $0x30] sm:$0xff]
  %v50 = vld [vmem:[%s2 + $0x38] sm:$0xff]
  %v51 = vld [vmem:[%s2 + $0x40] sm:$0xff]
  %v52 = vld [vmem:[%s2 + $0x48] sm:$0xff]
  %v53 = vld [vmem:[%s3] sm:$0xf]
  %v55 = vlaneseq
  %v56 = vshrl.u32 %v55, 7
  %v57 = vsub.s32 0, %v56
  %v58 = vrot.slane %v53, %v57
  %v59 = vlaneseq
  %v60 = vshrl.u32 %v59, 7
  %v61 = vsub.s32 1, %v60
  %v62 = vrot.slane %v53, %v61
  %v63 = vlaneseq
  %v64 = vshrl.u32 %v63, 7
  %v65 = vsub.s32 2, %v64
  %v66 = vrot.slane %v53, %v65
  %v67 = vlaneseq
  %v68 = vshrl.u32 %v67, 7
  %v69 = vsub.s32 3, %v68
  %v70 = vrot.slane %v53, %v69
  %v83 = vunpack.c.l.b16 %v35
  %v84 = vunpack.c.l.b16 %v36
  %v85 = vunpack.c.l.b16 %v37
  %v86 = vunpack.c.l.b16 %v38
  %v87 = vunpack.c.l.b16 %v39
  %v88 = vunpack.c.l.b16 %v40
  %v89 = vunpack.c.l.b16 %v41
  %v90 = vunpack.c.l.b16 %v42
  %v91 = vpack.c.b16 %v84, %v83
  %v92 = vpack.c.b16 %v86, %v85
  %v93 = vpack.c.b16 %v88, %v87
  %v94 = vpack.c.b16 %v90, %v89
  %v105 = vunpack.c.l.b16 %v43
  %v106 = vunpack.c.h.b16 %v43
  %v107 = vunpack.c.l.b16 %v44
  %v108 = vunpack.c.h.b16 %v44
  %v109 = vunpack.c.l.b16 %v45
  %v110 = vunpack.c.h.b16 %v45
  %v111 = vunpack.c.l.b16 %v46
  %v112 = vunpack.c.h.b16 %v46
  %v113 = vunpack.c.l.b16 %v47
  %v114 = vunpack.c.h.b16 %v47
  %v115 = vunpack.c.l.b16 %v48
  %v116 = vunpack.c.h.b16 %v48
  %v117 = vunpack.c.l.b16 %v49
  %v118 = vunpack.c.h.b16 %v49
  %v119 = vunpack.c.l.b16 %v50
  %v120 = vunpack.c.h.b16 %v50
  %v121 = vunpack.c.l.b16 %v51
  %v122 = vunpack.c.h.b16 %v51
  %v123 = vunpack.c.l.b16 %v52
  %v124 = vunpack.c.h.b16 %v52
  %v125 = vpack.c.b16 %v109, %v105
  %v126 = vpack.c.b16 %v110, %v106
  %v127 = vpack.c.b16 %v111, %v107
  %v128 = vpack.c.b16 %v112, %v108
  %v129 = vpack.c.b16 %v117, %v113
  %v130 = vpack.c.b16 %v118, %v114
  %v131 = vpack.c.b16 %v119, %v115
  %v132 = vpack.c.b16 %v120, %v116
  %v133 = vpack.c.b16 %v121, %v121
  %v134 = vpack.c.b16 %v122, %v122
  %v135 = vpack.c.b16 %v123, %v123
  %v136 = vpack.c.b16 %v124, %v124
  %vm145 = vcmask 326656
  %v147 = vsel %vm145, %v91, 0
  %v150 = vsel %vm145, %v92, 0
  %v153 = vsel %vm145, %v93, 0
  %v156 = vsel %vm145, %v94, 0
  %vm158 = vcmask 1043456
  %v160 = vsel %vm158, %v133, 0
  %v163 = vsel %vm158, %v134, 0
  %v166 = vsel %vm158, %v135, 0
  %v169 = vsel %vm158, %v136, 0
  %171 = vmatprep.subr.bf16.mxu0 %v126
  %172 = vmatpush1.bf16.msra.mxu0 %v125
  %173 = vmatprep.subr.bf16.mxu0 %v130
  %174 = vmatpush1.bf16.msra.mxu0 %v129
  %175 = vmatprep.subr.bf16.mxu0 %v163
  %176 = vmatpush1.bf16.msra.mxu0 %v160
  %177 = vmatprep.subr.bf16.mxu0 0
  %178 = vmatpush1.bf16.msra.mxu0 0
  %179 = vmatprep.subr.bf16.mxu0 0
  %180 = vmatpush1.bf16.msra.mxu0 0
  %181 = vmatprep.subr.bf16.mxu0 0
  %182 = vmatpush1.bf16.msra.mxu0 0
  %183 = vmatprep.subr.bf16.mxu0 0
  %184 = vmatpush1.bf16.msra.mxu0 0
  %185 = vmatprep.subr.bf16.mxu0 0
  %186 = vmatpush1.bf16.msra.mxu0 0
  %187 = vmatprep.subr.bf16.mxu0 0
  %188 = vmatpush1.bf16.msra.mxu0 0
  %189 = vmatprep.subr.bf16.mxu0 0
  %190 = vmatpush1.bf16.msra.mxu0 0
  %191 = vmatprep.subr.bf16.mxu0 0
  %192 = vmatpush1.bf16.msra.mxu0 0
  %193 = vmatprep.subr.bf16.mxu0 0
  %194 = vmatpush1.bf16.msra.mxu0 0
  %195 = vmatprep.subr.bf16.mxu0 0
  %196 = vmatpush1.bf16.msra.mxu0 0
  %197 = vmatprep.subr.bf16.mxu0 0
  %198 = vmatpush1.bf16.msra.mxu0 0
  %199 = vmatprep.subr.bf16.mxu0 0
  %200 = vmatpush1.bf16.msra.mxu0 0
  %201 = vmatprep.subr.bf16.mxu0 0
  %202 = vmatpush1.bf16.msra.mxu0 0
  %203 = vmatprep.mubr.bf16.mxu0 0
  %204 = vmatmul.mubr.bf16.gmra.mrb[0].mxu0 %v147
  %v205 = vpop.f32.mrb[0].mxu0
  %v206 = vadd.f32 %v58, %v205
  %v207 = vpop.f32.mrb[0].mxu0
  %v208 = vadd.f32 %v62, %v207
  %v209 = vpop.f32.mrb[0].mxu0
  %v210 = vadd.f32 %v58, %v209
  %v211 = vpop.f32.mrb[0].mxu0
  %v212 = vadd.f32 %v62, %v211
  %213 = vmatprep.mubr.bf16.mxu0 0
  %214 = vmatmul.mubr.bf16.gmra.mrb[0].mxu0 %v150
  %v215 = vpop.f32.mrb[0].mxu0
  %v216 = vadd.f32 %v58, %v215
  %v217 = vpop.f32.mrb[0].mxu0
  %v218 = vadd.f32 %v62, %v217
  %v219 = vpop.f32.mrb[0].mxu0
  %v220 = vadd.f32 %v58, %v219
  %v221 = vpop.f32.mrb[0].mxu0
  %v222 = vadd.f32 %v62, %v221
  %223 = vmatprep.mubr.bf16.mxu0 0
  %224 = vmatmul.mubr.bf16.gmra.mrb[0].mxu0 %v153
  %v225 = vpop.f32.mrb[0].mxu0
  %v226 = vadd.f32 %v58, %v225
  %v227 = vpop.f32.mrb[0].mxu0
  %v228 = vadd.f32 %v62, %v227
  %v229 = vpop.f32.mrb[0].mxu0
  %v230 = vadd.f32 %v58, %v229
  %v231 = vpop.f32.mrb[0].mxu0
  %v232 = vadd.f32 %v62, %v231
  %233 = vmatprep.mubr.bf16.mxu0 0
  %234 = vmatmul.mubr.bf16.gmra.mrb[0].mxu0 %v156
  %v235 = vpop.f32.mrb[0].mxu0
  %v236 = vadd.f32 %v58, %v235
  %v237 = vpop.f32.mrb[0].mxu0
  %v238 = vadd.f32 %v62, %v237
  %v239 = vpop.f32.mrb[0].mxu0
  %v240 = vadd.f32 %v58, %v239
  %v241 = vpop.f32.mrb[0].mxu0
  %v242 = vadd.f32 %v62, %v241
  %243 = vdwg.mxu0
  %244 = vmatprep.subr.bf16.mxu0 %v128
  %245 = vmatpush1.bf16.msra.mxu0 %v127
  %246 = vmatprep.subr.bf16.mxu0 %v132
  %247 = vmatpush1.bf16.msra.mxu0 %v131
  %248 = vmatprep.subr.bf16.mxu0 %v169
  %249 = vmatpush1.bf16.msra.mxu0 %v166
  %250 = vmatprep.subr.bf16.mxu0 0
  %251 = vmatpush1.bf16.msra.mxu0 0
  %252 = vmatprep.subr.bf16.mxu0 0
  %253 = vmatpush1.bf16.msra.mxu0 0
  %254 = vmatprep.subr.bf16.mxu0 0
  %255 = vmatpush1.bf16.msra.mxu0 0
  %256 = vmatprep.subr.bf16.mxu0 0
  %257 = vmatpush1.bf16.msra.mxu0 0
  %258 = vmatprep.subr.bf16.mxu0 0
  %259 = vmatpush1.bf16.msra.mxu0 0
  %260 = vmatprep.subr.bf16.mxu0 0
  %261 = vmatpush1.bf16.msra.mxu0 0
  %262 = vmatprep.subr.bf16.mxu0 0
  %263 = vmatpush1.bf16.msra.mxu0 0
  %264 = vmatprep.subr.bf16.mxu0 0
  %265 = vmatpush1.bf16.msra.mxu0 0
  %266 = vmatprep.subr.bf16.mxu0 0
  %267 = vmatpush1.bf16.msra.mxu0 0
  %268 = vmatprep.subr.bf16.mxu0 0
  %269 = vmatpush1.bf16.msra.mxu0 0
  %270 = vmatprep.subr.bf16.mxu0 0
  %271 = vmatpush1.bf16.msra.mxu0 0
  %272 = vmatprep.subr.bf16.mxu0 0
  %273 = vmatpush1.bf16.msra.mxu0 0
  %274 = vmatprep.subr.bf16.mxu0 0
  %275 = vmatpush1.bf16.msra.mxu0 0
  %276 = vmatprep.mubr.bf16.mxu0 0
  %277 = vmatmul.mubr.bf16.gmra.mrb[0].mxu0 %v147
  %v278 = vpop.f32.mrb[0].mxu0
  %v279 = vadd.f32 %v66, %v278
  %v280 = vpop.f32.mrb[0].mxu0
  %v281 = vadd.f32 %v70, %v280
  %v282 = vpop.f32.mrb[0].mxu0
  %v283 = vadd.f32 %v66, %v282
  %v284 = vpop.f32.mrb[0].mxu0
  %v285 = vadd.f32 %v70, %v284
  %286 = vmatprep.mubr.bf16.mxu0 0
  %287 = vmatmul.mubr.bf16.gmra.mrb[0].mxu0 %v150
  %v288 = vpop.f32.mrb[0].mxu0
  %v289 = vadd.f32 %v66, %v288
  %v290 = vpop.f32.mrb[0].mxu0
  %v291 = vadd.f32 %v70, %v290
  %v292 = vpop.f32.mrb[0].mxu0
  %v293 = vadd.f32 %v66, %v292
  %v294 = vpop.f32.mrb[0].mxu0
  %v295 = vadd.f32 %v70, %v294
  %296 = vmatprep.mubr.bf16.mxu0 0
  %297 = vmatmul.mubr.bf16.gmra.mrb[0].mxu0 %v153
  %v298 = vpop.f32.mrb[0].mxu0
  %v299 = vadd.f32 %v66, %v298
  %v300 = vpop.f32.mrb[0].mxu0
  %v301 = vadd.f32 %v70, %v300
  %v302 = vpop.f32.mrb[0].mxu0
  %v303 = vadd.f32 %v66, %v302
  %v304 = vpop.f32.mrb[0].mxu0
  %v305 = vadd.f32 %v70, %v304
  %306 = vmatprep.mubr.bf16.mxu0 0
  %307 = vmatmul.mubr.bf16.gmra.mrb[0].mxu0 %v156
  %v308 = vpop.f32.mrb[0].mxu0
  %v309 = vadd.f32 %v66, %v308
  %v310 = vpop.f32.mrb[0].mxu0
  %v311 = vadd.f32 %v70, %v310
  %v312 = vpop.f32.mrb[0].mxu0
  %v313 = vadd.f32 %v66, %v312
  %v314 = vpop.f32.mrb[0].mxu0
  %v315 = vadd.f32 %v70, %v314
  %316 = vdwg.mxu0
  %317 = vst [vmem:[#allocation2] sm:$0xff] %v206
  %318 = vst [vmem:[#allocation2 + $0x8] sm:$0xff] %v208
  %319 = vst [vmem:[#allocation2 + $0x10] sm:$0xff] %v279
  %320 = vst [vmem:[#allocation2 + $0x18] sm:$0xff] %v281
  %321 = vst [vmem:[#allocation2 + $0x20] sm:$0xff] %v210
  %322 = vst [vmem:[#allocation2 + $0x28] sm:$0xff] %v212
  %323 = vst [vmem:[#allocation2 + $0x30] sm:$0xff] %v283
  %324 = vst [vmem:[#allocation2 + $0x38] sm:$0xff] %v285
  %325 = vst [vmem:[#allocation2 + $0x40] sm:$0xff] %v216
  %326 = vst [vmem:[#allocation2 + $0x48] sm:$0xff] %v218
  %327 = vst [vmem:[#allocation2 + $0x50] sm:$0xff] %v289
  %328 = vst [vmem:[#allocation2 + $0x58] sm:$0xff] %v291
  %329 = vst [vmem:[#allocation2 + $0x60] sm:$0xff] %v220
  %330 = vst [vmem:[#allocation2 + $0x68] sm:$0xff] %v222
  %331 = vst [vmem:[#allocation2 + $0x70] sm:$0xff] %v293
  %332 = vst [vmem:[#allocation2 + $0x78] sm:$0xff] %v295
  %333 = vst [vmem:[#allocation2 + $0x80] sm:$0xff] %v226
  %334 = vst [vmem:[#allocation2 + $0x88] sm:$0xff] %v228
  %335 = vst [vmem:[#allocation2 + $0x90] sm:$0xff] %v299
  %336 = vst [vmem:[#allocation2 + $0x98] sm:$0xff] %v301
  %337 = vst [vmem:[#allocation2 + $0xa0] sm:$0xff] %v230
  %338 = vst [vmem:[#allocation2 + $0xa8] sm:$0xff] %v232
  %339 = vst [vmem:[#allocation2 + $0xb0] sm:$0xff] %v303
  %340 = vst [vmem:[#allocation2 + $0xb8] sm:$0xff] %v305
  %341 = vst [vmem:[#allocation2 + $0xc0] sm:$0xff] %v236
  %342 = vst [vmem:[#allocation2 + $0xc8] sm:$0xff] %v238
  %343 = vst [vmem:[#allocation2 + $0xd0] sm:$0xff] %v309
  %344 = vst [vmem:[#allocation2 + $0xd8] sm:$0xff] %v311
  %345 = vst [vmem:[#allocation2 + $0xe0] sm:$0xff] %v240
  %346 = vst [vmem:[#allocation2 + $0xe8] sm:$0xff] %v242
  %347 = vst [vmem:[#allocation2 + $0xf0] sm:$0xff] %v313
  %348 = vst [vmem:[#allocation2 + $0xf8] sm:$0xff] %v315
  %v349 = vld [vmem:[%s1] sm:$0xff]
  %v350 = vld [vmem:[%s1 + $0x8] sm:$0xff]
  %v351 = vld [vmem:[%s1 + $0x10] sm:$0xff]
  %v352 = vld [vmem:[%s1 + $0x18] sm:$0xff]
  %v353 = vld [vmem:[%s1 + $0x20] sm:$0xff]
  %v354 = vld [vmem:[%s1 + $0x28] sm:$0xff]
  %v355 = vld [vmem:[%s1 + $0x30] sm:$0xff]
  %v356 = vld [vmem:[%s1 + $0x38] sm:$0xff]
  %vm357 = vcmp.gt.f32.partialorder %v349, 0.0
  %vm358 = vcmp.gt.f32.partialorder %v350, 0.0
  %vm359 = vcmp.gt.f32.partialorder %v351, 0.0
  %vm360 = vcmp.gt.f32.partialorder %v352, 0.0
  %vm361 = vcmp.gt.f32.partialorder %v353, 0.0
  %vm362 = vcmp.gt.f32.partialorder %v354, 0.0
  %vm363 = vcmp.gt.f32.partialorder %v355, 0.0
  %vm364 = vcmp.gt.f32.partialorder %v356, 0.0
  %v365 = vld [vmem:[#allocation2] sm:$0xff]
  %v366 = vld [vmem:[#allocation2 + $0x8] sm:$0xff]
  %v367 = vld [vmem:[#allocation2 + $0x10] sm:$0xff]
  %v368 = vld [vmem:[#allocation2 + $0x18] sm:$0xff]
  %v369 = vld [vmem:[%s4] sm:$0xff]
  %v370 = vld [vmem:[%s4 + $0x8] sm:$0xff]
  %v371 = vld [vmem:[%s4 + $0x10] sm:$0xff]
  %v372 = vld [vmem:[%s4 + $0x18] sm:$0xff]
  %v373 = vld [vmem:[%s4 + $0x20] sm:$0xff]
  %v374 = vld [vmem:[%s4 + $0x28] sm:$0xff]
  %v375 = vld [vmem:[%s4 + $0x30] sm:$0xff]
  %v376 = vld [vmem:[%s4 + $0x38] sm:$0xff]
  %v377 = vld [vmem:[%s4 + $0x40] sm:$0xff]
  %v378 = vld [vmem:[%s4 + $0x48] sm:$0xff]
  %v379 = vld [vmem:[%s4 + $0x50] sm:$0xff]
  %v380 = vld [vmem:[%s4 + $0x58] sm:$0xff]
  %v381 = vld [vmem:[%s4 + $0x60] sm:$0xff]
  %v382 = vld [vmem:[%s4 + $0x68] sm:$0xff]
  %v383 = vld [vmem:[%s4 + $0x70] sm:$0xff]
  %v384 = vld [vmem:[%s4 + $0x78] sm:$0xff]
  %v385 = vld [vmem:[%s4 + $0x80] sm:$0xff]
  %v386 = vld [vmem:[%s4 + $0x88] sm:$0xff]
  %v387 = vld [vmem:[%s4 + $0x90] sm:$0xff]
  %v388 = vld [vmem:[%s4 + $0x98] sm:$0xff]
  %v389 = vld [vmem:[%s4 + $0xa0] sm:$0xff]
  %v390 = vld [vmem:[%s4 + $0xa8] sm:$0xff]
  %v391 = vld [vmem:[%s4 + $0xb0] sm:$0xff]
  %v392 = vld [vmem:[%s4 + $0xb8] sm:$0xff]
  %v393 = vld [vmem:[%s4 + $0xc0] sm:$0xff]
  %v394 = vld [vmem:[%s4 + $0xc8] sm:$0xff]
  %v395 = vld [vmem:[%s4 + $0xd0] sm:$0xff]
  %v396 = vld [vmem:[%s4 + $0xd8] sm:$0xff]
  %v397 = vld [vmem:[%s4 + $0xe0] sm:$0xff]
  %v398 = vld [vmem:[%s4 + $0xe8] sm:$0xff]
  %v399 = vld [vmem:[%s4 + $0xf0] sm:$0xff]
  %v400 = vld [vmem:[%s4 + $0xf8] sm:$0xff]
  %v433 = vunpack.c.l.b16 %v369
  %v434 = vunpack.c.h.b16 %v369
  %v435 = vunpack.c.l.b16 %v370
  %v436 = vunpack.c.h.b16 %v370
  %v437 = vunpack.c.l.b16 %v371
  %v438 = vunpack.c.h.b16 %v371
  %v439 = vunpack.c.l.b16 %v372
  %v440 = vunpack.c.h.b16 %v372
  %v441 = vunpack.c.l.b16 %v373
  %v442 = vunpack.c.h.b16 %v373
  %v443 = vunpack.c.l.b16 %v374
  %v444 = vunpack.c.h.b16 %v374
  %v445 = vunpack.c.l.b16 %v375
  %v446 = vunpack.c.h.b16 %v375
  %v447 = vunpack.c.l.b16 %v376
  %v448 = vunpack.c.h.b16 %v376
  %v449 = vunpack.c.l.b16 %v377
  %v450 = vunpack.c.h.b16 %v377
  %v451 = vunpack.c.l.b16 %v378
  %v452 = vunpack.c.h.b16 %v378
  %v453 = vunpack.c.l.b16 %v379
  %v454 = vunpack.c.h.b16 %v379
  %v455 = vunpack.c.l.b16 %v380
  %v456 = vunpack.c.h.b16 %v380
  %v457 = vunpack.c.l.b16 %v381
  %v458 = vunpack.c.h.b16 %v381
  %v459 = vunpack.c.l.b16 %v382
  %v460 = vunpack.c.h.b16 %v382
  %v461 = vunpack.c.l.b16 %v383
  %v462 = vunpack.c.h.b16 %v383
  %v463 = vunpack.c.l.b16 %v384
  %v464 = vunpack.c.h.b16 %v384
  %v465 = vunpack.c.l.b16 %v385
  %v466 = vunpack.c.h.b16 %v385
  %v467 = vunpack.c.l.b16 %v386
  %v468 = vunpack.c.h.b16 %v386
  %v469 = vunpack.c.l.b16 %v387
  %v470 = vunpack.c.h.b16 %v387
  %v471 = vunpack.c.l.b16 %v388
  %v472 = vunpack.c.h.b16 %v388
  %v473 = vunpack.c.l.b16 %v389
  %v474 = vunpack.c.h.b16 %v389
  %v475 = vunpack.c.l.b16 %v390
  %v476 = vunpack.c.h.b16 %v390
  %v477 = vunpack.c.l.b16 %v391
  %v478 = vunpack.c.h.b16 %v391
  %v479 = vunpack.c.l.b16 %v392
  %v480 = vunpack.c.h.b16 %v392
  %v481 = vunpack.c.l.b16 %v393
  %v482 = vunpack.c.h.b16 %v393
  %v483 = vunpack.c.l.b16 %v394
  %v484 = vunpack.c.h.b16 %v394
  %v485 = vunpack.c.l.b16 %v395
  %v486 = vunpack.c.h.b16 %v395
  %v487 = vunpack.c.l.b16 %v396
  %v488 = vunpack.c.h.b16 %v396
  %v489 = vunpack.c.l.b16 %v397
  %v490 = vunpack.c.h.b16 %v397
  %v491 = vunpack.c.l.b16 %v398
  %v492 = vunpack.c.h.b16 %v398
  %v493 = vunpack.c.l.b16 %v399
  %v494 = vunpack.c.h.b16 %v399
  %v495 = vunpack.c.l.b16 %v400
  %v496 = vunpack.c.h.b16 %v400
  %v497 = vpack.c.b16 %v437, %v433
  %v498 = vpack.c.b16 %v438, %v434
  %v499 = vpack.c.b16 %v439, %v435
  %v500 = vpack.c.b16 %v440, %v436
  %v501 = vpack.c.b16 %v445, %v441
  %v502 = vpack.c.b16 %v446, %v442
  %v503 = vpack.c.b16 %v447, %v443
  %v504 = vpack.c.b16 %v448, %v444
  %v505 = vpack.c.b16 %v453, %v449
  %v506 = vpack.c.b16 %v454, %v450
  %v507 = vpack.c.b16 %v455, %v451
  %v508 = vpack.c.b16 %v456, %v452
  %v509 = vpack.c.b16 %v461, %v457
  %v510 = vpack.c.b16 %v462, %v458
  %v511 = vpack.c.b16 %v463, %v459
  %v512 = vpack.c.b16 %v464, %v460
  %v513 = vpack.c.b16 %v469, %v465
  %v514 = vpack.c.b16 %v470, %v466
  %v515 = vpack.c.b16 %v471, %v467
  %v516 = vpack.c.b16 %v472, %v468
  %v517 = vpack.c.b16 %v477, %v473
  %v518 = vpack.c.b16 %v478, %v474
  %v519 = vpack.c.b16 %v479, %v475
  %v520 = vpack.c.b16 %v480, %v476
  %v521 = vpack.c.b16 %v485, %v481
  %v522 = vpack.c.b16 %v486, %v482
  %v523 = vpack.c.b16 %v487, %v483
  %v524 = vpack.c.b16 %v488, %v484
  %v525 = vpack.c.b16 %v493, %v489
  %v526 = vpack.c.b16 %v494, %v490
  %v527 = vpack.c.b16 %v495, %v491
  %v528 = vpack.c.b16 %v496, %v492
  %561 = vmatprep.subr.bf16.mxu0 %v498
  %562 = vmatpush1.bf16.msra.mxu0 %v497
  %563 = vmatprep.subr.bf16.mxu0 %v502
  %564 = vmatpush1.bf16.msra.mxu0 %v501
  %565 = vmatprep.subr.bf16.mxu0 %v506
  %566 = vmatpush1.bf16.msra.mxu0 %v505
  %567 = vmatprep.subr.bf16.mxu0 %v510
  %568 = vmatpush1.bf16.msra.mxu0 %v509
  %569 = vmatprep.subr.bf16.mxu0 %v514
  %570 = vmatpush1.bf16.msra.mxu0 %v513
  %571 = vmatprep.subr.bf16.mxu0 %v518
  %572 = vmatpush1.bf16.msra.mxu0 %v517
  %573 = vmatprep.subr.bf16.mxu0 %v522
  %574 = vmatpush1.bf16.msra.mxu0 %v521
  %575 = vmatprep.subr.bf16.mxu0 %v526
  %576 = vmatpush1.bf16.msra.mxu0 %v525
  %577 = vmatprep.subr.bf16.mxu0 0
  %578 = vmatpush1.bf16.msra.mxu0 0
  %579 = vmatprep.subr.bf16.mxu0 0
  %580 = vmatpush1.bf16.msra.mxu0 0
  %581 = vmatprep.subr.bf16.mxu0 0
  %582 = vmatpush1.bf16.msra.mxu0 0
  %583 = vmatprep.subr.bf16.mxu0 0
  %584 = vmatpush1.bf16.msra.mxu0 0
  %585 = vmatprep.subr.bf16.mxu0 0
  %586 = vmatpush1.bf16.msra.mxu0 0
  %587 = vmatprep.subr.bf16.mxu0 0
  %588 = vmatpush1.bf16.msra.mxu0 0
  %589 = vmatprep.subr.bf16.mxu0 0
  %590 = vmatpush1.bf16.msra.mxu0 0
  %591 = vmatprep.subr.bf16.mxu0 0
  %592 = vmatpush1.bf16.msra.mxu0 0
  %593 = vmatprep.mubr.bf16.mxu0 0
  %594 = vmatmul.mubr.bf16.gmra.mrb[0].mxu0 0
  %v595 = vpop.f32.mrb[0].mxu0
  %v596 = vadd.f32 0.0, %v595
  %v597 = vpop.f32.mrb[0].mxu0
  %v598 = vadd.f32 0.0, %v597
  %v599 = vpop.f32.mrb[0].mxu0
  %v600 = vpop.f32.mrb[0].mxu0
  %601 = vdwg.mxu0
  %602 = vmatprep.subr.bf16.mxu0 %v500
  %603 = vmatpush1.bf16.msra.mxu0 %v499
  %604 = vmatprep.subr.bf16.mxu0 %v504
  %605 = vmatpush1.bf16.msra.mxu0 %v503
  %606 = vmatprep.subr.bf16.mxu0 %v508
  %607 = vmatpush1.bf16.msra.mxu0 %v507
  %608 = vmatprep.subr.bf16.mxu0 %v512
  %609 = vmatpush1.bf16.msra.mxu0 %v511
  %610 = vmatprep.subr.bf16.mxu0 %v516
  %611 = vmatpush1.bf16.msra.mxu0 %v515
  %612 = vmatprep.subr.bf16.mxu0 %v520
  %613 = vmatpush1.bf16.msra.mxu0 %v519
  %614 = vmatprep.subr.bf16.mxu0 %v524
  %615 = vmatpush1.bf16.msra.mxu0 %v523
  %616 = vmatprep.subr.bf16.mxu0 %v528
  %617 = vmatpush1.bf16.msra.mxu0 %v527
  %618 = vmatprep.subr.bf16.mxu0 0
  %619 = vmatpush1.bf16.msra.mxu0 0
  %620 = vmatprep.subr.bf16.mxu0 0
  %621 = vmatpush1.bf16.msra.mxu0 0
  %622 = vmatprep.subr.bf16.mxu0 0
  %623 = vmatpush1.bf16.msra.mxu0 0
  %624 = vmatprep.subr.bf16.mxu0 0
  %625 = vmatpush1.bf16.msra.mxu0 0
  %626 = vmatprep.subr.bf16.mxu0 0
  %627 = vmatpush1.bf16.msra.mxu0 0
  %628 = vmatprep.subr.bf16.mxu0 0
  %629 = vmatpush1.bf16.msra.mxu0 0
  %630 = vmatprep.subr.bf16.mxu0 0
  %631 = vmatpush1.bf16.msra.mxu0 0
  %632 = vmatprep.subr.bf16.mxu0 0
  %633 = vmatpush1.bf16.msra.mxu0 0
  %634 = vmatprep.mubr.bf16.mxu0 0
  %635 = vmatmul.mubr.bf16.gmra.mrb[0].mxu0 0
  %v636 = vpop.f32.mrb[0].mxu0
  %v637 = vadd.f32 0.0, %v636
  %v638 = vpop.f32.mrb[0].mxu0
  %v639 = vadd.f32 0.0, %v638
  %v640 = vpop.f32.mrb[0].mxu0
  %v641 = vpop.f32.mrb[0].mxu0
  %642 = vdwg.mxu0
  %v643 = vadd.f32 %v365, %v596
  %v644 = vadd.f32 %v366, %v598
  %v645 = vadd.f32 %v367, %v637
  %v646 = vadd.f32 %v368, %v639
  %v647 = vmul.f32 %v643, 0.5
  %v648 = vtanh.pop %v647
  %v649 = vmul.f32 %v648, 0.5
  %v650 = vadd.f32 %v649, 0.5
  %v651 = vmul.f32 %v644, 0.5
  %v652 = vtanh.pop %v651
  %v653 = vmul.f32 %v652, 0.5
  %v654 = vadd.f32 %v653, 0.5
  %v655 = vtanh.pop %v645
  %v656 = vmul.f32 %v646, 0.5
  %v657 = vtanh.pop %v656
  %v658 = vmul.f32 %v657, 0.5
  %v659 = vadd.f32 %v658, 0.5
  %v660 = vmul.f32 %v654, 0.0
  %v661 = vmul.f32 %v650, %v655
  %v662 = vadd.f32 %v660, %v661
  %v663 = vtanh.pop %v662
  %v664 = vmul.f32 %v659, %v663
  %v665 = vsel %vm357, %v664, 0.0
  %v666 = vsel %vm357, %v662, 0.0
  %v667 = vld [vmem:[#allocation2 + $0x20] sm:$0xff]
  %v668 = vld [vmem:[#allocation2 + $0x28] sm:$0xff]
  %v669 = vld [vmem:[#allocation2 + $0x30] sm:$0xff]
  %v670 = vld [vmem:[#allocation2 + $0x38] sm:$0xff]
  %v671 = vpack.c.bf16 %v665, %v665
  %672 = vmatprep.subr.bf16.mxu0 %v498
  %673 = vmatpush1.bf16.msra.mxu0 %v497
  %674 = vmatprep.subr.bf16.mxu0 %v502
  %675 = vmatpush1.bf16.msra.mxu0 %v501
  %676 = vmatprep.subr.bf16.mxu0 %v506
  %677 = vmatpush1.bf16.msra.mxu0 %v505
  %678 = vmatprep.subr.bf16.mxu0 %v510
  %679 = vmatpush1.bf16.msra.mxu0 %v509
  %680 = vmatprep.subr.bf16.mxu0 %v514
  %681 = vmatpush1.bf16.msra.mxu0 %v513
  %682 = vmatprep.subr.bf16.mxu0 %v518
  %683 = vmatpush1.bf16.msra.mxu0 %v517
  %684 = vmatprep.subr.bf16.mxu0 %v522
  %685 = vmatpush1.bf16.msra.mxu0 %v521
  %686 = vmatprep.subr.bf16.mxu0 %v526
  %687 = vmatpush1.bf16.msra.mxu0 %v525
  %688 = vmatprep.subr.bf16.mxu0 0
  %689 = vmatpush1.bf16.msra.mxu0 0
  %690 = vmatprep.subr.bf16.mxu0 0
  %691 = vmatpush1.bf16.msra.mxu0 0
  %692 = vmatprep.subr.bf16.mxu0 0
  %693 = vmatpush1.bf16.msra.mxu0 0
  %694 = vmatprep.subr.bf16.mxu0 0
  %695 = vmatpush1.bf16.msra.mxu0 0
  %696 = vmatprep.subr.bf16.mxu0 0
  %697 = vmatpush1.bf16.msra.mxu0 0
  %698 = vmatprep.subr.bf16.mxu0 0
  %699 = vmatpush1.bf16.msra.mxu0 0
  %700 = vmatprep.subr.bf16.mxu0 0
  %701 = vmatpush1.bf16.msra.mxu0 0
  %702 = vmatprep.subr.bf16.mxu0 0
  %703 = vmatpush1.bf16.msra.mxu0 0
  %704 = vmatprep.mubr.bf16.mxu0 0
  %705 = vmatmul.mubr.bf16.gmra.mrb[0].mxu0 %v671
  %v706 = vpop.f32.mrb[0].mxu0
  %v707 = vadd.f32 0.0, %v706
  %v708 = vpop.f32.mrb[0].mxu0
  %v709 = vadd.f32 0.0, %v708
  %v710 = vpop.f32.mrb[0].mxu0
  %v711 = vpop.f32.mrb[0].mxu0
  %712 = vdwg.mxu0
  %713 = vmatprep.subr.bf16.mxu0 %v500
  %714 = vmatpush1.bf16.msra.mxu0 %v499
  %715 = vmatprep.subr.bf16.mxu0 %v504
  %716 = vmatpush1.bf16.msra.mxu0 %v503
  %717 = vmatprep.subr.bf16.mxu0 %v508
  %718 = vmatpush1.bf16.msra.mxu0 %v507
  %719 = vmatprep.subr.bf16.mxu0 %v512
  %720 = vmatpush1.bf16.msra.mxu0 %v511
  %721 = vmatprep.subr.bf16.mxu0 %v516
  %722 = vmatpush1.bf16.msra.mxu0 %v515
  %723 = vmatprep.subr.bf16.mxu0 %v520
  %724 = vmatpush1.bf16.msra.mxu0 %v519
  %725 = vmatprep.subr.bf16.mxu0 %v524
  %726 = vmatpush1.bf16.msra.mxu0 %v523
  %727 = vmatprep.subr.bf16.mxu0 %v528
  %728 = vmatpush1.bf16.msra.mxu0 %v527
  %729 = vmatprep.subr.bf16.mxu0 0
  %730 = vmatpush1.bf16.msra.mxu0 0
  %731 = vmatprep.subr.bf16.mxu0 0
  %732 = vmatpush1.bf16.msra.mxu0 0
  %733 = vmatprep.subr.bf16.mxu0 0
  %734 = vmatpush1.bf16.msra.mxu0 0
  %735 = vmatprep.subr.bf16.mxu0 0
  %736 = vmatpush1.bf16.msra.mxu0 0
  %737 = vmatprep.subr.bf16.mxu0 0
  %738 = vmatpush1.bf16.msra.mxu0 0
  %739 = vmatprep.subr.bf16.mxu0 0
  %740 = vmatpush1.bf16.msra.mxu0 0
  %741 = vmatprep.subr.bf16.mxu0 0
  %742 = vmatpush1.bf16.msra.mxu0 0
  %743 = vmatprep.subr.bf16.mxu0 0
  %744 = vmatpush1.bf16.msra.mxu0 0
  %745 = vmatprep.mubr.bf16.mxu0 0
  %746 = vmatmul.mubr.bf16.gmra.mrb[0].mxu0 %v671
  %v747 = vpop.f32.mrb[0].mxu0
  %v748 = vadd.f32 0.0, %v747
  %v749 = vpop.f32.mrb[0].mxu0
  %v750 = vadd.f32 0.0, %v749
  %v751 = vpop.f32.mrb[0].mxu0
  %v752 = vpop.f32.mrb[0].mxu0
  %753 = vdwg.mxu0
  %v754 = vadd.f32 %v667, %v707
  %v755 = vadd.f32 %v668, %v709
  %v756 = vadd.f32 %v669, %v748
  %v757 = vadd.f32 %v670, %v750
  %v758 = vmul.f32 %v754, 0.5
  %v759 = vtanh.pop %v758
  %v760 = vmul.f32 %v759, 0.5
  %v761 = vadd.f32 %v760, 0.5
  %v762 = vmul.f32 %v755, 0.5
  %v763 = vtanh.pop %v762
  %v764 = vmul.f32 %v763, 0.5
  %v765 = vadd.f32 %v764, 0.5
  %v766 = vtanh.pop %v756
  %v767 = vmul.f32 %v757, 0.5
  %v768 = vtanh.pop %v767
  %v769 = vmul.f32 %v768, 0.5
  %v770 = vadd.f32 %v769, 0.5
  %v771 = vmul.f32 %v765, %v666
  %v772 = vmul.f32 %v761, %v766
  %v773 = vadd.f32 %v771, %v772
  %v774 = vtanh.pop %v773
  %v775 = vmul.f32 %v770, %v774
  %v776 = vsel %vm358, %v775, %v665
  %v777 = vsel %vm358, %v773, %v666
  %v778 = vld [vmem:[#allocation2 + $0x40] sm:$0xff]
  %v779 = vld [vmem:[#allocation2 + $0x48] sm:$0xff]
  %v780 = vld [vmem:[#allocation2 + $0x50] sm:$0xff]
  %v781 = vld [vmem:[#allocation2 + $0x58] sm:$0xff]
  %v782 = vpack.c.bf16 %v776, %v776
  %783 = vmatprep.subr.bf16.mxu0 %v498
  %784 = vmatpush1.bf16.msra.mxu0 %v497
  %785 = vmatprep.subr.bf16.mxu0 %v502
  %786 = vmatpush1.bf16.msra.mxu0 %v501
  %787 = vmatprep.subr.bf16.mxu0 %v506
  %788 = vmatpush1.bf16.msra.mxu0 %v505
  %789 = vmatprep.subr.bf16.mxu0 %v510
  %790 = vmatpush1.bf16.msra.mxu0 %v509
  %791 = vmatprep.subr.bf16.mxu0 %v514
  %792 = vmatpush1.bf16.msra.mxu0 %v513
  %793 = vmatprep.subr.bf16.mxu0 %v518
  %794 = vmatpush1.bf16.msra.mxu0 %v517
  %795 = vmatprep.subr.bf16.mxu0 %v522
  %796 = vmatpush1.bf16.msra.mxu0 %v521
  %797 = vmatprep.subr.bf16.mxu0 %v526
  %798 = vmatpush1.bf16.msra.mxu0 %v525
  %799 = vmatprep.subr.bf16.mxu0 0
  %800 = vmatpush1.bf16.msra.mxu0 0
  %801 = vmatprep.subr.bf16.mxu0 0
  %802 = vmatpush1.bf16.msra.mxu0 0
  %803 = vmatprep.subr.bf16.mxu0 0
  %804 = vmatpush1.bf16.msra.mxu0 0
  %805 = vmatprep.subr.bf16.mxu0 0
  %806 = vmatpush1.bf16.msra.mxu0 0
  %807 = vmatprep.subr.bf16.mxu0 0
  %808 = vmatpush1.bf16.msra.mxu0 0
  %809 = vmatprep.subr.bf16.mxu0 0
  %810 = vmatpush1.bf16.msra.mxu0 0
  %811 = vmatprep.subr.bf16.mxu0 0
  %812 = vmatpush1.bf16.msra.mxu0 0
  %813 = vmatprep.subr.bf16.mxu0 0
  %814 = vmatpush1.bf16.msra.mxu0 0
  %815 = vmatprep.mubr.bf16.mxu0 0
  %816 = vmatmul.mubr.bf16.gmra.mrb[0].mxu0 %v782
  %v817 = vpop.f32.mrb[0].mxu0
  %v818 = vadd.f32 0.0, %v817
  %v819 = vpop.f32.mrb[0].mxu0
  %v820 = vadd.f32 0.0, %v819
  %v821 = vpop.f32.mrb[0].mxu0
  %v822 = vpop.f32.mrb[0].mxu0
  %823 = vdwg.mxu0
  %824 = vmatprep.subr.bf16.mxu0 %v500
  %825 = vmatpush1.bf16.msra.mxu0 %v499
  %826 = vmatprep.subr.bf16.mxu0 %v504
  %827 = vmatpush1.bf16.msra.mxu0 %v503
  %828 = vmatprep.subr.bf16.mxu0 %v508
  %829 = vmatpush1.bf16.msra.mxu0 %v507
  %830 = vmatprep.subr.bf16.mxu0 %v512
  %831 = vmatpush1.bf16.msra.mxu0 %v511
  %832 = vmatprep.subr.bf16.mxu0 %v516
  %833 = vmatpush1.bf16.msra.mxu0 %v515
  %834 = vmatprep.subr.bf16.mxu0 %v520
  %835 = vmatpush1.bf16.msra.mxu0 %v519
  %836 = vmatprep.subr.bf16.mxu0 %v524
  %837 = vmatpush1.bf16.msra.mxu0 %v523
  %838 = vmatprep.subr.bf16.mxu0 %v528
  %839 = vmatpush1.bf16.msra.mxu0 %v527
  %840 = vmatprep.subr.bf16.mxu0 0
  %841 = vmatpush1.bf16.msra.mxu0 0
  %842 = vmatprep.subr.bf16.mxu0 0
  %843 = vmatpush1.bf16.msra.mxu0 0
  %844 = vmatprep.subr.bf16.mxu0 0
  %845 = vmatpush1.bf16.msra.mxu0 0
  %846 = vmatprep.subr.bf16.mxu0 0
  %847 = vmatpush1.bf16.msra.mxu0 0
  %848 = vmatprep.subr.bf16.mxu0 0
  %849 = vmatpush1.bf16.msra.mxu0 0
  %850 = vmatprep.subr.bf16.mxu0 0
  %851 = vmatpush1.bf16.msra.mxu0 0
  %852 = vmatprep.subr.bf16.mxu0 0
  %853 = vmatpush1.bf16.msra.mxu0 0
  %854 = vmatprep.subr.bf16.mxu0 0
  %855 = vmatpush1.bf16.msra.mxu0 0
  %856 = vmatprep.mubr.bf16.mxu0 0
  %857 = vmatmul.mubr.bf16.gmra.mrb[0].mxu0 %v782
  %v858 = vpop.f32.mrb[0].mxu0
  %v859 = vadd.f32 0.0, %v858
  %v860 = vpop.f32.mrb[0].mxu0
  %v861 = vadd.f32 0.0, %v860
  %v862 = vpop.f32.mrb[0].mxu0
  %v863 = vpop.f32.mrb[0].mxu0
  %864 = vdwg.mxu0
  %v865 = vadd.f32 %v778, %v818
  %v866 = vadd.f32 %v779, %v820
  %v867 = vadd.f32 %v780, %v859
  %v868 = vadd.f32 %v781, %v861
  %v869 = vmul.f32 %v865, 0.5
  %v870 = vtanh.pop %v869
  %v871 = vmul.f32 %v870, 0.5
  %v872 = vadd.f32 %v871, 0.5
  %v873 = vmul.f32 %v866, 0.5
  %v874 = vtanh.pop %v873
  %v875 = vmul.f32 %v874, 0.5
  %v876 = vadd.f32 %v875, 0.5
  %v877 = vtanh.pop %v867
  %v878 = vmul.f32 %v868, 0.5
  %v879 = vtanh.pop %v878
  %v880 = vmul.f32 %v879, 0.5
  %v881 = vadd.f32 %v880, 0.5
  %v882 = vmul.f32 %v876, %v777
  %v883 = vmul.f32 %v872, %v877
  %v884 = vadd.f32 %v882, %v883
  %v885 = vtanh.pop %v884
  %v886 = vmul.f32 %v881, %v885
  %v887 = vsel %vm359, %v886, %v776
  %v888 = vsel %vm359, %v884, %v777
  %v889 = vld [vmem:[#allocation2 + $0x60] sm:$0xff]
  %v890 = vld [vmem:[#allocation2 + $0x68] sm:$0xff]
  %v891 = vld [vmem:[#allocation2 + $0x70] sm:$0xff]
  %v892 = vld [vmem:[#allocation2 + $0x78] sm:$0xff]
  %v893 = vpack.c.bf16 %v887, %v887
  %894 = vmatprep.subr.bf16.mxu0 %v498
  %895 = vmatpush1.bf16.msra.mxu0 %v497
  %896 = vmatprep.subr.bf16.mxu0 %v502
  %897 = vmatpush1.bf16.msra.mxu0 %v501
  %898 = vmatprep.subr.bf16.mxu0 %v506
  %899 = vmatpush1.bf16.msra.mxu0 %v505
  %900 = vmatprep.subr.bf16.mxu0 %v510
  %901 = vmatpush1.bf16.msra.mxu0 %v509
  %902 = vmatprep.subr.bf16.mxu0 %v514
  %903 = vmatpush1.bf16.msra.mxu0 %v513
  %904 = vmatprep.subr.bf16.mxu0 %v518
  %905 = vmatpush1.bf16.msra.mxu0 %v517
  %906 = vmatprep.subr.bf16.mxu0 %v522
  %907 = vmatpush1.bf16.msra.mxu0 %v521
  %908 = vmatprep.subr.bf16.mxu0 %v526
  %909 = vmatpush1.bf16.msra.mxu0 %v525
  %910 = vmatprep.subr.bf16.mxu0 0
  %911 = vmatpush1.bf16.msra.mxu0 0
  %912 = vmatprep.subr.bf16.mxu0 0
  %913 = vmatpush1.bf16.msra.mxu0 0
  %914 = vmatprep.subr.bf16.mxu0 0
  %915 = vmatpush1.bf16.msra.mxu0 0
  %916 = vmatprep.subr.bf16.mxu0 0
  %917 = vmatpush1.bf16.msra.mxu0 0
  %918 = vmatprep.subr.bf16.mxu0 0
  %919 = vmatpush1.bf16.msra.mxu0 0
  %920 = vmatprep.subr.bf16.mxu0 0
  %921 = vmatpush1.bf16.msra.mxu0 0
  %922 = vmatprep.subr.bf16.mxu0 0
  %923 = vmatpush1.bf16.msra.mxu0 0
  %924 = vmatprep.subr.bf16.mxu0 0
  %925 = vmatpush1.bf16.msra.mxu0 0
  %926 = vmatprep.mubr.bf16.mxu0 0
  %927 = vmatmul.mubr.bf16.gmra.mrb[0].mxu0 %v893
  %v928 = vpop.f32.mrb[0].mxu0
  %v929 = vadd.f32 0.0, %v928
  %v930 = vpop.f32.mrb[0].mxu0
  %v931 = vadd.f32 0.0, %v930
  %v932 = vpop.f32.mrb[0].mxu0
  %v933 = vpop.f32.mrb[0].mxu0
  %934 = vdwg.mxu0
  %935 = vmatprep.subr.bf16.mxu0 %v500
  %936 = vmatpush1.bf16.msra.mxu0 %v499
  %937 = vmatprep.subr.bf16.mxu0 %v504
  %938 = vmatpush1.bf16.msra.mxu0 %v503
  %939 = vmatprep.subr.bf16.mxu0 %v508
  %940 = vmatpush1.bf16.msra.mxu0 %v507
  %941 = vmatprep.subr.bf16.mxu0 %v512
  %942 = vmatpush1.bf16.msra.mxu0 %v511
  %943 = vmatprep.subr.bf16.mxu0 %v516
  %944 = vmatpush1.bf16.msra.mxu0 %v515
  %945 = vmatprep.subr.bf16.mxu0 %v520
  %946 = vmatpush1.bf16.msra.mxu0 %v519
  %947 = vmatprep.subr.bf16.mxu0 %v524
  %948 = vmatpush1.bf16.msra.mxu0 %v523
  %949 = vmatprep.subr.bf16.mxu0 %v528
  %950 = vmatpush1.bf16.msra.mxu0 %v527
  %951 = vmatprep.subr.bf16.mxu0 0
  %952 = vmatpush1.bf16.msra.mxu0 0
  %953 = vmatprep.subr.bf16.mxu0 0
  %954 = vmatpush1.bf16.msra.mxu0 0
  %955 = vmatprep.subr.bf16.mxu0 0
  %956 = vmatpush1.bf16.msra.mxu0 0
  %957 = vmatprep.subr.bf16.mxu0 0
  %958 = vmatpush1.bf16.msra.mxu0 0
  %959 = vmatprep.subr.bf16.mxu0 0
  %960 = vmatpush1.bf16.msra.mxu0 0
  %961 = vmatprep.subr.bf16.mxu0 0
  %962 = vmatpush1.bf16.msra.mxu0 0
  %963 = vmatprep.subr.bf16.mxu0 0
  %964 = vmatpush1.bf16.msra.mxu0 0
  %965 = vmatprep.subr.bf16.mxu0 0
  %966 = vmatpush1.bf16.msra.mxu0 0
  %967 = vmatprep.mubr.bf16.mxu0 0
  %968 = vmatmul.mubr.bf16.gmra.mrb[0].mxu0 %v893
  %v969 = vpop.f32.mrb[0].mxu0
  %v970 = vadd.f32 0.0, %v969
  %v971 = vpop.f32.mrb[0].mxu0
  %v972 = vadd.f32 0.0, %v971
  %v973 = vpop.f32.mrb[0].mxu0
  %v974 = vpop.f32.mrb[0].mxu0
  %975 = vdwg.mxu0
  %v976 = vadd.f32 %v889, %v929
  %v977 = vadd.f32 %v890, %v931
  %v978 = vadd.f32 %v891, %v970
  %v979 = vadd.f32 %v892, %v972
  %v980 = vmul.f32 %v976, 0.5
  %v981 = vtanh.pop %v980
  %v982 = vmul.f32 %v981, 0.5
  %v983 = vadd.f32 %v982, 0.5
  %v984 = vmul.f32 %v977, 0.5
  %v985 = vtanh.pop %v984
  %v986 = vmul.f32 %v985, 0.5
  %v987 = vadd.f32 %v986, 0.5
  %v988 = vtanh.pop %v978
  %v989 = vmul.f32 %v979, 0.5
  %v990 = vtanh.pop %v989
  %v991 = vmul.f32 %v990, 0.5
  %v992 = vadd.f32 %v991, 0.5
  %v993 = vmul.f32 %v987, %v888
  %v994 = vmul.f32 %v983, %v988
  %v995 = vadd.f32 %v993, %v994
  %v996 = vtanh.pop %v995
  %v997 = vmul.f32 %v992, %v996
  %v998 = vsel %vm360, %v997, %v887
  %v999 = vsel %vm360, %v995, %v888
  %v1000 = vld [vmem:[#allocation2 + $0x80] sm:$0xff]
  %v1001 = vld [vmem:[#allocation2 + $0x88] sm:$0xff]
  %v1002 = vld [vmem:[#allocation2 + $0x90] sm:$0xff]
  %v1003 = vld [vmem:[#allocation2 + $0x98] sm:$0xff]
  %v1004 = vpack.c.bf16 %v998, %v998
  %1005 = vmatprep.subr.bf16.mxu0 %v498
  %1006 = vmatpush1.bf16.msra.mxu0 %v497
  %1007 = vmatprep.subr.bf16.mxu0 %v502
  %1008 = vmatpush1.bf16.msra.mxu0 %v501
  %1009 = vmatprep.subr.bf16.mxu0 %v506
  %1010 = vmatpush1.bf16.msra.mxu0 %v505
  %1011 = vmatprep.subr.bf16.mxu0 %v510
  %1012 = vmatpush1.bf16.msra.mxu0 %v509
  %1013 = vmatprep.subr.bf16.mxu0 %v514
  %1014 = vmatpush1.bf16.msra.mxu0 %v513
  %1015 = vmatprep.subr.bf16.mxu0 %v518
  %1016 = vmatpush1.bf16.msra.mxu0 %v517
  %1017 = vmatprep.subr.bf16.mxu0 %v522
  %1018 = vmatpush1.bf16.msra.mxu0 %v521
  %1019 = vmatprep.subr.bf16.mxu0 %v526
  %1020 = vmatpush1.bf16.msra.mxu0 %v525
  %1021 = vmatprep.subr.bf16.mxu0 0
  %1022 = vmatpush1.bf16.msra.mxu0 0
  %1023 = vmatprep.subr.bf16.mxu0 0
  %1024 = vmatpush1.bf16.msra.mxu0 0
  %1025 = vmatprep.subr.bf16.mxu0 0
  %1026 = vmatpush1.bf16.msra.mxu0 0
  %1027 = vmatprep.subr.bf16.mxu0 0
  %1028 = vmatpush1.bf16.msra.mxu0 0
  %1029 = vmatprep.subr.bf16.mxu0 0
  %1030 = vmatpush1.bf16.msra.mxu0 0
  %1031 = vmatprep.subr.bf16.mxu0 0
  %1032 = vmatpush1.bf16.msra.mxu0 0
  %1033 = vmatprep.subr.bf16.mxu0 0
  %1034 = vmatpush1.bf16.msra.mxu0 0
  %1035 = vmatprep.subr.bf16.mxu0 0
  %1036 = vmatpush1.bf16.msra.mxu0 0
  %1037 = vmatprep.mubr.bf16.mxu0 0
  %1038 = vmatmul.mubr.bf16.gmra.mrb[0].mxu0 %v1004
  %v1039 = vpop.f32.mrb[0].mxu0
  %v1040 = vadd.f32 0.0, %v1039
  %v1041 = vpop.f32.mrb[0].mxu0
  %v1042 = vadd.f32 0.0, %v1041
  %v1043 = vpop.f32.mrb[0].mxu0
  %v1044 = vpop.f32.mrb[0].mxu0
  %1045 = vdwg.mxu0
  %1046 = vmatprep.subr.bf16.mxu0 %v500
  %1047 = vmatpush1.bf16.msra.mxu0 %v499
  %1048 = vmatprep.subr.bf16.mxu0 %v504
  %1049 = vmatpush1.bf16.msra.mxu0 %v503
  %1050 = vmatprep.subr.bf16.mxu0 %v508
  %1051 = vmatpush1.bf16.msra.mxu0 %v507
  %1052 = vmatprep.subr.bf16.mxu0 %v512
  %1053 = vmatpush1.bf16.msra.mxu0 %v511
  %1054 = vmatprep.subr.bf16.mxu0 %v516
  %1055 = vmatpush1.bf16.msra.mxu0 %v515
  %1056 = vmatprep.subr.bf16.mxu0 %v520
  %1057 = vmatpush1.bf16.msra.mxu0 %v519
  %1058 = vmatprep.subr.bf16.mxu0 %v524
  %1059 = vmatpush1.bf16.msra.mxu0 %v523
  %1060 = vmatprep.subr.bf16.mxu0 %v528
  %1061 = vmatpush1.bf16.msra.mxu0 %v527
  %1062 = vmatprep.subr.bf16.mxu0 0
  %1063 = vmatpush1.bf16.msra.mxu0 0
  %1064 = vmatprep.subr.bf16.mxu0 0
  %1065 = vmatpush1.bf16.msra.mxu0 0
  %1066 = vmatprep.subr.bf16.mxu0 0
  %1067 = vmatpush1.bf16.msra.mxu0 0
  %1068 = vmatprep.subr.bf16.mxu0 0
  %1069 = vmatpush1.bf16.msra.mxu0 0
  %1070 = vmatprep.subr.bf16.mxu0 0
  %1071 = vmatpush1.bf16.msra.mxu0 0
  %1072 = vmatprep.subr.bf16.mxu0 0
  %1073 = vmatpush1.bf16.msra.mxu0 0
  %1074 = vmatprep.subr.bf16.mxu0 0
  %1075 = vmatpush1.bf16.msra.mxu0 0
  %1076 = vmatprep.subr.bf16.mxu0 0
  %1077 = vmatpush1.bf16.msra.mxu0 0
  %1078 = vmatprep.mubr.bf16.mxu0 0
  %1079 = vmatmul.mubr.bf16.gmra.mrb[0].mxu0 %v1004
  %v1080 = vpop.f32.mrb[0].mxu0
  %v1081 = vadd.f32 0.0, %v1080
  %v1082 = vpop.f32.mrb[0].mxu0
  %v1083 = vadd.f32 0.0, %v1082
  %v1084 = vpop.f32.mrb[0].mxu0
  %v1085 = vpop.f32.mrb[0].mxu0
  %1086 = vdwg.mxu0
  %v1087 = vadd.f32 %v1000, %v1040
  %v1088 = vadd.f32 %v1001, %v1042
  %v1089 = vadd.f32 %v1002, %v1081
  %v1090 = vadd.f32 %v1003, %v1083
  %v1091 = vmul.f32 %v1087, 0.5
  %v1092 = vtanh.pop %v1091
  %v1093 = vmul.f32 %v1092, 0.5
  %v1094 = vadd.f32 %v1093, 0.5
  %v1095 = vmul.f32 %v1088, 0.5
  %v1096 = vtanh.pop %v1095
  %v1097 = vmul.f32 %v1096, 0.5
  %v1098 = vadd.f32 %v1097, 0.5
  %v1099 = vtanh.pop %v1089
  %v1100 = vmul.f32 %v1090, 0.5
  %v1101 = vtanh.pop %v1100
  %v1102 = vmul.f32 %v1101, 0.5
  %v1103 = vadd.f32 %v1102, 0.5
  %v1104 = vmul.f32 %v1098, %v999
  %v1105 = vmul.f32 %v1094, %v1099
  %v1106 = vadd.f32 %v1104, %v1105
  %v1107 = vtanh.pop %v1106
  %v1108 = vmul.f32 %v1103, %v1107
  %v1109 = vsel %vm361, %v1108, %v998
  %v1110 = vsel %vm361, %v1106, %v999
  %v1111 = vld [vmem:[#allocation2 + $0xa0] sm:$0xff]
  %v1112 = vld [vmem:[#allocation2 + $0xa8] sm:$0xff]
  %v1113 = vld [vmem:[#allocation2 + $0xb0] sm:$0xff]
  %v1114 = vld [vmem:[#allocation2 + $0xb8] sm:$0xff]
  %v1115 = vpack.c.bf16 %v1109, %v1109
  %1116 = vmatprep.subr.bf16.mxu0 %v498
  %1117 = vmatpush1.bf16.msra.mxu0 %v497
  %1118 = vmatprep.subr.bf16.mxu0 %v502
  %1119 = vmatpush1.bf16.msra.mxu0 %v501
  %1120 = vmatprep.subr.bf16.mxu0 %v506
  %1121 = vmatpush1.bf16.msra.mxu0 %v505
  %1122 = vmatprep.subr.bf16.mxu0 %v510
  %1123 = vmatpush1.bf16.msra.mxu0 %v509
  %1124 = vmatprep.subr.bf16.mxu0 %v514
  %1125 = vmatpush1.bf16.msra.mxu0 %v513
  %1126 = vmatprep.subr.bf16.mxu0 %v518
  %1127 = vmatpush1.bf16.msra.mxu0 %v517
  %1128 = vmatprep.subr.bf16.mxu0 %v522
  %1129 = vmatpush1.bf16.msra.mxu0 %v521
  %1130 = vmatprep.subr.bf16.mxu0 %v526
  %1131 = vmatpush1.bf16.msra.mxu0 %v525
  %1132 = vmatprep.subr.bf16.mxu0 0
  %1133 = vmatpush1.bf16.msra.mxu0 0
  %1134 = vmatprep.subr.bf16.mxu0 0
  %1135 = vmatpush1.bf16.msra.mxu0 0
  %1136 = vmatprep.subr.bf16.mxu0 0
  %1137 = vmatpush1.bf16.msra.mxu0 0
  %1138 = vmatprep.subr.bf16.mxu0 0
  %1139 = vmatpush1.bf16.msra.mxu0 0
  %1140 = vmatprep.subr.bf16.mxu0 0
  %1141 = vmatpush1.bf16.msra.mxu0 0
  %1142 = vmatprep.subr.bf16.mxu0 0
  %1143 = vmatpush1.bf16.msra.mxu0 0
  %1144 = vmatprep.subr.bf16.mxu0 0
  %1145 = vmatpush1.bf16.msra.mxu0 0
  %1146 = vmatprep.subr.bf16.mxu0 0
  %1147 = vmatpush1.bf16.msra.mxu0 0
  %1148 = vmatprep.mubr.bf16.mxu0 0
  %1149 = vmatmul.mubr.bf16.gmra.mrb[0].mxu0 %v1115
  %v1150 = vpop.f32.mrb[0].mxu0
  %v1151 = vadd.f32 0.0, %v1150
  %v1152 = vpop.f32.mrb[0].mxu0
  %v1153 = vadd.f32 0.0, %v1152
  %v1154 = vpop.f32.mrb[0].mxu0
  %v1155 = vpop.f32.mrb[0].mxu0
  %1156 = vdwg.mxu0
  %1157 = vmatprep.subr.bf16.mxu0 %v500
  %1158 = vmatpush1.bf16.msra.mxu0 %v499
  %1159 = vmatprep.subr.bf16.mxu0 %v504
  %1160 = vmatpush1.bf16.msra.mxu0 %v503
  %1161 = vmatprep.subr.bf16.mxu0 %v508
  %1162 = vmatpush1.bf16.msra.mxu0 %v507
  %1163 = vmatprep.subr.bf16.mxu0 %v512
  %1164 = vmatpush1.bf16.msra.mxu0 %v511
  %1165 = vmatprep.subr.bf16.mxu0 %v516
  %1166 = vmatpush1.bf16.msra.mxu0 %v515
  %1167 = vmatprep.subr.bf16.mxu0 %v520
  %1168 = vmatpush1.bf16.msra.mxu0 %v519
  %1169 = vmatprep.subr.bf16.mxu0 %v524
  %1170 = vmatpush1.bf16.msra.mxu0 %v523
  %1171 = vmatprep.subr.bf16.mxu0 %v528
  %1172 = vmatpush1.bf16.msra.mxu0 %v527
  %1173 = vmatprep.subr.bf16.mxu0 0
  %1174 = vmatpush1.bf16.msra.mxu0 0
  %1175 = vmatprep.subr.bf16.mxu0 0
  %1176 = vmatpush1.bf16.msra.mxu0 0
  %1177 = vmatprep.subr.bf16.mxu0 0
  %1178 = vmatpush1.bf16.msra.mxu0 0
  %1179 = vmatprep.subr.bf16.mxu0 0
  %1180 = vmatpush1.bf16.msra.mxu0 0
  %1181 = vmatprep.subr.bf16.mxu0 0
  %1182 = vmatpush1.bf16.msra.mxu0 0
  %1183 = vmatprep.subr.bf16.mxu0 0
  %1184 = vmatpush1.bf16.msra.mxu0 0
  %1185 = vmatprep.subr.bf16.mxu0 0
  %1186 = vmatpush1.bf16.msra.mxu0 0
  %1187 = vmatprep.subr.bf16.mxu0 0
  %1188 = vmatpush1.bf16.msra.mxu0 0
  %1189 = vmatprep.mubr.bf16.mxu0 0
  %1190 = vmatmul.mubr.bf16.gmra.mrb[0].mxu0 %v1115
  %v1191 = vpop.f32.mrb[0].mxu0
  %v1192 = vadd.f32 0.0, %v1191
  %v1193 = vpop.f32.mrb[0].mxu0
  %v1194 = vadd.f32 0.0, %v1193
  %v1195 = vpop.f32.mrb[0].mxu0
  %v1196 = vpop.f32.mrb[0].mxu0
  %1197 = vdwg.mxu0
  %v1198 = vadd.f32 %v1111, %v1151
  %v1199 = vadd.f32 %v1112, %v1153
  %v1200 = vadd.f32 %v1113, %v1192
  %v1201 = vadd.f32 %v1114, %v1194
  %v1202 = vmul.f32 %v1198, 0.5
  %v1203 = vtanh.pop %v1202
  %v1204 = vmul.f32 %v1203, 0.5
  %v1205 = vadd.f32 %v1204, 0.5
  %v1206 = vmul.f32 %v1199, 0.5
  %v1207 = vtanh.pop %v1206
  %v1208 = vmul.f32 %v1207, 0.5
  %v1209 = vadd.f32 %v1208, 0.5
  %v1210 = vtanh.pop %v1200
  %v1211 = vmul.f32 %v1201, 0.5
  %v1212 = vtanh.pop %v1211
  %v1213 = vmul.f32 %v1212, 0.5
  %v1214 = vadd.f32 %v1213, 0.5
  %v1215 = vmul.f32 %v1209, %v1110
  %v1216 = vmul.f32 %v1205, %v1210
  %v1217 = vadd.f32 %v1215, %v1216
  %v1218 = vtanh.pop %v1217
  %v1219 = vmul.f32 %v1214, %v1218
  %v1220 = vsel %vm362, %v1219, %v1109
  %v1221 = vsel %vm362, %v1217, %v1110
  %v1222 = vld [vmem:[#allocation2 + $0xc0] sm:$0xff]
  %v1223 = vld [vmem:[#allocation2 + $0xc8] sm:$0xff]
  %v1224 = vld [vmem:[#allocation2 + $0xd0] sm:$0xff]
  %v1225 = vld [vmem:[#allocation2 + $0xd8] sm:$0xff]
  %v1226 = vpack.c.bf16 %v1220, %v1220
  %1227 = vmatprep.subr.bf16.mxu0 %v498
  %1228 = vmatpush1.bf16.msra.mxu0 %v497
  %1229 = vmatprep.subr.bf16.mxu0 %v502
  %1230 = vmatpush1.bf16.msra.mxu0 %v501
  %1231 = vmatprep.subr.bf16.mxu0 %v506
  %1232 = vmatpush1.bf16.msra.mxu0 %v505
  %1233 = vmatprep.subr.bf16.mxu0 %v510
  %1234 = vmatpush1.bf16.msra.mxu0 %v509
  %1235 = vmatprep.subr.bf16.mxu0 %v514
  %1236 = vmatpush1.bf16.msra.mxu0 %v513
  %1237 = vmatprep.subr.bf16.mxu0 %v518
  %1238 = vmatpush1.bf16.msra.mxu0 %v517
  %1239 = vmatprep.subr.bf16.mxu0 %v522
  %1240 = vmatpush1.bf16.msra.mxu0 %v521
  %1241 = vmatprep.subr.bf16.mxu0 %v526
  %1242 = vmatpush1.bf16.msra.mxu0 %v525
  %1243 = vmatprep.subr.bf16.mxu0 0
  %1244 = vmatpush1.bf16.msra.mxu0 0
  %1245 = vmatprep.subr.bf16.mxu0 0
  %1246 = vmatpush1.bf16.msra.mxu0 0
  %1247 = vmatprep.subr.bf16.mxu0 0
  %1248 = vmatpush1.bf16.msra.mxu0 0
  %1249 = vmatprep.subr.bf16.mxu0 0
  %1250 = vmatpush1.bf16.msra.mxu0 0
  %1251 = vmatprep.subr.bf16.mxu0 0
  %1252 = vmatpush1.bf16.msra.mxu0 0
  %1253 = vmatprep.subr.bf16.mxu0 0
  %1254 = vmatpush1.bf16.msra.mxu0 0
  %1255 = vmatprep.subr.bf16.mxu0 0
  %1256 = vmatpush1.bf16.msra.mxu0 0
  %1257 = vmatprep.subr.bf16.mxu0 0
  %1258 = vmatpush1.bf16.msra.mxu0 0
  %1259 = vmatprep.mubr.bf16.mxu0 0
  %1260 = vmatmul.mubr.bf16.gmra.mrb[0].mxu0 %v1226
  %v1261 = vpop.f32.mrb[0].mxu0
  %v1262 = vadd.f32 0.0, %v1261
  %v1263 = vpop.f32.mrb[0].mxu0
  %v1264 = vadd.f32 0.0, %v1263
  %v1265 = vpop.f32.mrb[0].mxu0
  %v1266 = vpop.f32.mrb[0].mxu0
  %1267 = vdwg.mxu0
  %1268 = vmatprep.subr.bf16.mxu0 %v500
  %1269 = vmatpush1.bf16.msra.mxu0 %v499
  %1270 = vmatprep.subr.bf16.mxu0 %v504
  %1271 = vmatpush1.bf16.msra.mxu0 %v503
  %1272 = vmatprep.subr.bf16.mxu0 %v508
  %1273 = vmatpush1.bf16.msra.mxu0 %v507
  %1274 = vmatprep.subr.bf16.mxu0 %v512
  %1275 = vmatpush1.bf16.msra.mxu0 %v511
  %1276 = vmatprep.subr.bf16.mxu0 %v516
  %1277 = vmatpush1.bf16.msra.mxu0 %v515
  %1278 = vmatprep.subr.bf16.mxu0 %v520
  %1279 = vmatpush1.bf16.msra.mxu0 %v519
  %1280 = vmatprep.subr.bf16.mxu0 %v524
  %1281 = vmatpush1.bf16.msra.mxu0 %v523
  %1282 = vmatprep.subr.bf16.mxu0 %v528
  %1283 = vmatpush1.bf16.msra.mxu0 %v527
  %1284 = vmatprep.subr.bf16.mxu0 0
  %1285 = vmatpush1.bf16.msra.mxu0 0
  %1286 = vmatprep.subr.bf16.mxu0 0
  %1287 = vmatpush1.bf16.msra.mxu0 0
  %1288 = vmatprep.subr.bf16.mxu0 0
  %1289 = vmatpush1.bf16.msra.mxu0 0
  %1290 = vmatprep.subr.bf16.mxu0 0
  %1291 = vmatpush1.bf16.msra.mxu0 0
  %1292 = vmatprep.subr.bf16.mxu0 0
  %1293 = vmatpush1.bf16.msra.mxu0 0
  %1294 = vmatprep.subr.bf16.mxu0 0
  %1295 = vmatpush1.bf16.msra.mxu0 0
  %1296 = vmatprep.subr.bf16.mxu0 0
  %1297 = vmatpush1.bf16.msra.mxu0 0
  %1298 = vmatprep.subr.bf16.mxu0 0
  %1299 = vmatpush1.bf16.msra.mxu0 0
  %1300 = vmatprep.mubr.bf16.mxu0 0
  %1301 = vmatmul.mubr.bf16.gmra.mrb[0].mxu0 %v1226
  %v1302 = vpop.f32.mrb[0].mxu0
  %v1303 = vadd.f32 0.0, %v1302
  %v1304 = vpop.f32.mrb[0].mxu0
  %v1305 = vadd.f32 0.0, %v1304
  %v1306 = vpop.f32.mrb[0].mxu0
  %v1307 = vpop.f32.mrb[0].mxu0
  %1308 = vdwg.mxu0
  %v1309 = vadd.f32 %v1222, %v1262
  %v1310 = vadd.f32 %v1223, %v1264
  %v1311 = vadd.f32 %v1224, %v1303
  %v1312 = vadd.f32 %v1225, %v1305
  %v1313 = vmul.f32 %v1309, 0.5
  %v1314 = vtanh.pop %v1313
  %v1315 = vmul.f32 %v1314, 0.5
  %v1316 = vadd.f32 %v1315, 0.5
  %v1317 = vmul.f32 %v1310, 0.5
  %v1318 = vtanh.pop %v1317
  %v1319 = vmul.f32 %v1318, 0.5
  %v1320 = vadd.f32 %v1319, 0.5
  %v1321 = vtanh.pop %v1311
  %v1322 = vmul.f32 %v1312, 0.5
  %v1323 = vtanh.pop %v1322
  %v1324 = vmul.f32 %v1323, 0.5
  %v1325 = vadd.f32 %v1324, 0.5
  %v1326 = vmul.f32 %v1320, %v1221
  %v1327 = vmul.f32 %v1316, %v1321
  %v1328 = vadd.f32 %v1326, %v1327
  %v1329 = vtanh.pop %v1328
  %v1330 = vmul.f32 %v1325, %v1329
  %v1331 = vsel %vm363, %v1330, %v1220
  %v1332 = vsel %vm363, %v1328, %v1221
  %v1333 = vld [vmem:[#allocation2 + $0xe0] sm:$0xff]
  %v1334 = vld [vmem:[#allocation2 + $0xe8] sm:$0xff]
  %v1335 = vld [vmem:[#allocation2 + $0xf0] sm:$0xff]
  %v1336 = vld [vmem:[#allocation2 + $0xf8] sm:$0xff]
  %v1337 = vpack.c.bf16 %v1331, %v1331
  %1338 = vmatprep.subr.bf16.mxu0 %v498
  %1339 = vmatpush1.bf16.msra.mxu0 %v497
  %1340 = vmatprep.subr.bf16.mxu0 %v502
  %1341 = vmatpush1.bf16.msra.mxu0 %v501
  %1342 = vmatprep.subr.bf16.mxu0 %v506
  %1343 = vmatpush1.bf16.msra.mxu0 %v505
  %1344 = vmatprep.subr.bf16.mxu0 %v510
  %1345 = vmatpush1.bf16.msra.mxu0 %v509
  %1346 = vmatprep.subr.bf16.mxu0 %v514
  %1347 = vmatpush1.bf16.msra.mxu0 %v513
  %1348 = vmatprep.subr.bf16.mxu0 %v518
  %1349 = vmatpush1.bf16.msra.mxu0 %v517
  %1350 = vmatprep.subr.bf16.mxu0 %v522
  %1351 = vmatpush1.bf16.msra.mxu0 %v521
  %1352 = vmatprep.subr.bf16.mxu0 %v526
  %1353 = vmatpush1.bf16.msra.mxu0 %v525
  %1354 = vmatprep.subr.bf16.mxu0 0
  %1355 = vmatpush1.bf16.msra.mxu0 0
  %1356 = vmatprep.subr.bf16.mxu0 0
  %1357 = vmatpush1.bf16.msra.mxu0 0
  %1358 = vmatprep.subr.bf16.mxu0 0
  %1359 = vmatpush1.bf16.msra.mxu0 0
  %1360 = vmatprep.subr.bf16.mxu0 0
  %1361 = vmatpush1.bf16.msra.mxu0 0
  %1362 = vmatprep.subr.bf16.mxu0 0
  %1363 = vmatpush1.bf16.msra.mxu0 0
  %1364 = vmatprep.subr.bf16.mxu0 0
  %1365 = vmatpush1.bf16.msra.mxu0 0
  %1366 = vmatprep.subr.bf16.mxu0 0
  %1367 = vmatpush1.bf16.msra.mxu0 0
  %1368 = vmatprep.subr.bf16.mxu0 0
  %1369 = vmatpush1.bf16.msra.mxu0 0
  %1370 = vmatprep.mubr.bf16.mxu0 0
  %1371 = vmatmul.mubr.bf16.gmra.mrb[0].mxu0 %v1337
  %v1372 = vpop.f32.mrb[0].mxu0
  %v1373 = vadd.f32 0.0, %v1372
  %v1374 = vpop.f32.mrb[0].mxu0
  %v1375 = vadd.f32 0.0, %v1374
  %v1376 = vpop.f32.mrb[0].mxu0
  %v1377 = vpop.f32.mrb[0].mxu0
  %1378 = vdwg.mxu0
  %1379 = vmatprep.subr.bf16.mxu0 %v500
  %1380 = vmatpush1.bf16.msra.mxu0 %v499
  %1381 = vmatprep.subr.bf16.mxu0 %v504
  %1382 = vmatpush1.bf16.msra.mxu0 %v503
  %1383 = vmatprep.subr.bf16.mxu0 %v508
  %1384 = vmatpush1.bf16.msra.mxu0 %v507
  %1385 = vmatprep.subr.bf16.mxu0 %v512
  %1386 = vmatpush1.bf16.msra.mxu0 %v511
  %1387 = vmatprep.subr.bf16.mxu0 %v516
  %1388 = vmatpush1.bf16.msra.mxu0 %v515
  %1389 = vmatprep.subr.bf16.mxu0 %v520
  %1390 = vmatpush1.bf16.msra.mxu0 %v519
  %1391 = vmatprep.subr.bf16.mxu0 %v524
  %1392 = vmatpush1.bf16.msra.mxu0 %v523
  %1393 = vmatprep.subr.bf16.mxu0 %v528
  %1394 = vmatpush1.bf16.msra.mxu0 %v527
  %1395 = vmatprep.subr.bf16.mxu0 0
  %1396 = vmatpush1.bf16.msra.mxu0 0
  %1397 = vmatprep.subr.bf16.mxu0 0
  %1398 = vmatpush1.bf16.msra.mxu0 0
  %1399 = vmatprep.subr.bf16.mxu0 0
  %1400 = vmatpush1.bf16.msra.mxu0 0
  %1401 = vmatprep.subr.bf16.mxu0 0
  %1402 = vmatpush1.bf16.msra.mxu0 0
  %1403 = vmatprep.subr.bf16.mxu0 0
  %1404 = vmatpush1.bf16.msra.mxu0 0
  %1405 = vmatprep.subr.bf16.mxu0 0
  %1406 = vmatpush1.bf16.msra.mxu0 0
  %1407 = vmatprep.subr.bf16.mxu0 0
  %1408 = vmatpush1.bf16.msra.mxu0 0
  %1409 = vmatprep.subr.bf16.mxu0 0
  %1410 = vmatpush1.bf16.msra.mxu0 0
  %1411 = vmatprep.mubr.bf16.mxu0 0
  %1412 = vmatmul.mubr.bf16.gmra.mrb[0].mxu0 %v1337
  %v1413 = vpop.f32.mrb[0].mxu0
  %v1414 = vadd.f32 0.0, %v1413
  %v1415 = vpop.f32.mrb[0].mxu0
  %v1416 = vadd.f32 0.0, %v1415
  %v1417 = vpop.f32.mrb[0].mxu0
  %v1418 = vpop.f32.mrb[0].mxu0
  %1419 = vdwg.mxu0
  %v1420 = vadd.f32 %v1333, %v1373
  %v1421 = vadd.f32 %v1334, %v1375
  %v1422 = vadd.f32 %v1335, %v1414
  %v1423 = vadd.f32 %v1336, %v1416
  %v1424 = vmul.f32 %v1420, 0.5
  %v1425 = vtanh.pop %v1424
  %v1426 = vmul.f32 %v1425, 0.5
  %v1427 = vadd.f32 %v1426, 0.5
  %v1428 = vmul.f32 %v1421, 0.5
  %v1429 = vtanh.pop %v1428
  %v1430 = vmul.f32 %v1429, 0.5
  %v1431 = vadd.f32 %v1430, 0.5
  %v1432 = vtanh.pop %v1422
  %v1433 = vmul.f32 %v1423, 0.5
  %v1434 = vtanh.pop %v1433
  %v1435 = vmul.f32 %v1434, 0.5
  %v1436 = vadd.f32 %v1435, 0.5
  %v1437 = vmul.f32 %v1431, %v1332
  %v1438 = vmul.f32 %v1427, %v1432
  %v1439 = vadd.f32 %v1437, %v1438
  %v1440 = vtanh.pop %v1439
  %v1441 = vmul.f32 %v1436, %v1440
  %v1442 = vsel %vm364, %v1441, %v1331
  %v1443 = vpack.c.bf16 %v1442, %v1442
  %v1444 = vld [vmem:[%s5] sm:$0xf]
  %v1445 = vld [vmem:[%s5 + $0x4] sm:$0xf]
  %v1446 = vld [vmem:[%s5 + $0x8] sm:$0xf]
  %v1447 = vld [vmem:[%s5 + $0xc] sm:$0xf]
  %v1448 = vld [vmem:[%s5 + $0x10] sm:$0xf]
  %v1449 = vld [vmem:[%s5 + $0x14] sm:$0xf]
  %v1450 = vld [vmem:[%s5 + $0x18] sm:$0xf]
  %v1451 = vld [vmem:[%s5 + $0x1c] sm:$0xf]
  %v1452 = vld [vmem:[%s5 + $0x20] sm:$0xf]
  %v1453 = vld [vmem:[%s5 + $0x24] sm:$0xf]
  %v1454 = vld [vmem:[%s5 + $0x28] sm:$0xf]
  %v1455 = vld [vmem:[%s5 + $0x2c] sm:$0xf]
  %v1456 = vld [vmem:[%s5 + $0x30] sm:$0xf]
  %v1457 = vld [vmem:[%s5 + $0x34] sm:$0xf]
  %v1458 = vld [vmem:[%s5 + $0x38] sm:$0xf]
  %v1459 = vld [vmem:[%s5 + $0x3c] sm:$0xf]
  %v1460 = vld [vmem:[%s6] sm:$0x1]
  %v1462 = vlaneseq
  %v1463 = vshrl.u32 %v1462, 7
  %v1464 = vsub.s32 0, %v1463
  %v1465 = vrot.slane %v1460, %v1464
  %v1483 = vunpack.c.l.b16 %v1444
  %v1484 = vunpack.c.l.b16 %v1445
  %v1485 = vunpack.c.l.b16 %v1446
  %v1486 = vunpack.c.l.b16 %v1447
  %v1487 = vunpack.c.l.b16 %v1448
  %v1488 = vunpack.c.l.b16 %v1449
  %v1489 = vunpack.c.l.b16 %v1450
  %v1490 = vunpack.c.l.b16 %v1451
  %v1491 = vunpack.c.l.b16 %v1452
  %v1492 = vunpack.c.l.b16 %v1453
  %v1493 = vunpack.c.l.b16 %v1454
  %v1494 = vunpack.c.l.b16 %v1455
  %v1495 = vunpack.c.l.b16 %v1456
  %v1496 = vunpack.c.l.b16 %v1457
  %v1497 = vunpack.c.l.b16 %v1458
  %v1498 = vunpack.c.l.b16 %v1459
  %v1499 = vpack.c.b16 %v1484, %v1483
  %v1500 = vpack.c.b16 %v1486, %v1485
  %v1501 = vpack.c.b16 %v1488, %v1487
  %v1502 = vpack.c.b16 %v1490, %v1489
  %v1503 = vpack.c.b16 %v1492, %v1491
  %v1504 = vpack.c.b16 %v1494, %v1493
  %v1505 = vpack.c.b16 %v1496, %v1495
  %v1506 = vpack.c.b16 %v1498, %v1497
  %1515 = vmatprep.subr.bf16.mxu0 0
  %1516 = vmatpush1.bf16.msra.mxu0 %v1499
  %1517 = vmatprep.subr.bf16.mxu0 0
  %1518 = vmatpush1.bf16.msra.mxu0 %v1500
  %1519 = vmatprep.subr.bf16.mxu0 0
  %1520 = vmatpush1.bf16.msra.mxu0 %v1501
  %1521 = vmatprep.subr.bf16.mxu0 0
  %1522 = vmatpush1.bf16.msra.mxu0 %v1502
  %1523 = vmatprep.subr.bf16.mxu0 0
  %1524 = vmatpush1.bf16.msra.mxu0 %v1503
  %1525 = vmatprep.subr.bf16.mxu0 0
  %1526 = vmatpush1.bf16.msra.mxu0 %v1504
  %1527 = vmatprep.subr.bf16.mxu0 0
  %1528 = vmatpush1.bf16.msra.mxu0 %v1505
  %1529 = vmatprep.subr.bf16.mxu0 0
  %1530 = vmatpush1.bf16.msra.mxu0 %v1506
  %1531 = vmatprep.subr.bf16.mxu0 0
  %1532 = vmatpush1.bf16.msra.mxu0 0
  %1533 = vmatprep.subr.bf16.mxu0 0
  %1534 = vmatpush1.bf16.msra.mxu0 0
  %1535 = vmatprep.subr.bf16.mxu0 0
  %1536 = vmatpush1.bf16.msra.mxu0 0
  %1537 = vmatprep.subr.bf16.mxu0 0
  %1538 = vmatpush1.bf16.msra.mxu0 0
  %1539 = vmatprep.subr.bf16.mxu0 0
  %1540 = vmatpush1.bf16.msra.mxu0 0
  %1541 = vmatprep.subr.bf16.mxu0 0
  %1542 = vmatpush1.bf16.msra.mxu0 0
  %1543 = vmatprep.subr.bf16.mxu0 0
  %1544 = vmatpush1.bf16.msra.mxu0 0
  %1545 = vmatprep.subr.bf16.mxu0 0
  %1546 = vmatpush1.bf16.msra.mxu0 0
  %1547 = vmatprep.mubr.bf16.mxu0 0
  %1548 = vmatmul.mubr.bf16.gmra.mrb[0].mxu0 %v1443
  %v1549 = vpop.f32.mrb[0].mxu0
  %v1550 = vadd.f32 %v1465, %v1549
  %v1551 = vpop.f32.mrb[0].mxu0
  %v1552 = vpop.f32.mrb[0].mxu0
  %v1553 = vpop.f32.mrb[0].mxu0
  %1554 = vdwg.mxu0
  %v1555 = vmax.f32 %v1550, 0.0
  %v1556 = vld [vmem:[%s7] sm:$0x1]
  %v1558 = vlaneseq
  %v1559 = vshrl.u32 %v1558, 7
  %v1560 = vsub.s32 0, %v1559
  %v1561 = vrot.slane %v1556, %v1560
  %v1563 = vmul.f32 %v1555, %v1561
  %vm1564 = vcmask 523264
  %v1565 = vsel %vm1564, %v1563, 0.0
  %1566 = vadd.xlane.f32.xlu0 %v1565
  %v1567 = vpop.xlane.xlu0 %1566
  %v1568 = vld [vmem:[#allocation3] sm:$0x1]
  %v1570 = vlaneseq
  %v1571 = vshrl.u32 %v1570, 7
  %v1572 = vsub.s32 0, %v1571
  %v1573 = vrot.slane %v1568, %v1572
  %v1575 = vadd.f32 %v1567, %v1573
  %v1576 = vmul.f32 %v1575, 0.5
  %v1577 = vtanh.pop %v1576
  %v1578 = vmul.f32 %v1577, 0.5
  %v1579 = vadd.f32 %v1578, 0.5
  %vm1580 = vcmask 7168
  %1581 = vst.msk [vmem:[%s9] sm:$0xff] %vm1580, %v1579
  // Predicated region
  $region38: #{rnn_forward.1} parent=0 // pred_check
    _
  $region39: #{rnn_forward.1} parent=0 // pred_check_branch
    %1583 = sbr.rel (0) target = $region41
  $region40: #{rnn_forward.1} parent=0 // pred_region
    _
  $region41: #{rnn_forward.1} parent=0 // pred_fallthru
    _
  // Predicated region
  $region42: #{rnn_forward.1} parent=0 // pred_check
    _
  $region43: #{rnn_forward.1} parent=0 // pred_check_branch
    %1585 = sbr.rel (0) target = $region45
  $region44: #{rnn_forward.1} parent=0 // pred_region
    _
  $region45: #{rnn_forward.1} parent=0 // pred_fallthru
    _

</llo_original>
